<compile_context>
chip_gen: v7x
topology: tpu7x:2x2x1
jax: 0.10.0
libtpu: 0.0.40
codegen_flags: <defaults>
</compile_context>

<pallas_src>
import functools

import numpy as np
import jax
import jax.numpy as jnp
from jax.experimental import pallas as pl
from jax.experimental.pallas import tpu as pltpu

# Full precision for the small XLA-side head / finalizers and the pure-JAX reference.
# The heavy in-kernel matmuls explicitly use native bf16 MXU with f32 accumulation.
jax.config.update("jax_default_matmul_precision", "highest")

_TILE_N = 1024                    # points per grid step (v7x-safe; good MXU fill on all gens)
_VMEM_LIMIT = 32 * 1024 * 1024    # explicit scoped-VMEM budget (lifts v5e's 16 MiB default)


def _relu(x):
    return jnp.maximum(x, 0.0)


def _dot_bf16(a_f32, w_bf16_ref):
    """Wide layer: bf16 x bf16 on the MXU, f32 accumulation (single native pass).
    The explicit precision arg keeps the global 'highest' setting from forcing a
    multi-pass algorithm on these in-kernel dots."""
    return jnp.dot(a_f32.astype(jnp.bfloat16), w_bf16_ref[...],
                   preferred_element_type=jnp.float32,
                   precision=jax.lax.Precision.DEFAULT)


def _k3_layer(x3, w_ref, b_ref):
    """C_in == 3 layer as VPU broadcast-FMAs (exact f32); a K=3 MXU matmul would waste the MXU."""
    return (x3[:, 0:1] * w_ref[0:1, :]
            + x3[:, 1:2] * w_ref[1:2, :]
            + x3[:, 2:3] * w_ref[2:3, :]
            + b_ref[...])


# ---------------------------------------------------------------------------
# Kernel A: STN3d point MLP (3->64->128->1024), running MAX over point tiles.
# Grid = (B, N_tiles); batch "parallel", point axis "arbitrary" (reduction).
# Output block (1,1,1024) is resident across the point axis (accumulator).
# conv3 bias + ReLU are hoisted to XLA (after the max-pool).
# ---------------------------------------------------------------------------
def _stn_pointmlp_kernel(x_ref, c1w, c1b, c2w, c2b, c3w, out_ref, *, n_points, tile_n):
    n = pl.program_id(1)

    @pl.when(n == 0)
    def _():
        out_ref[...] = jnp.full(out_ref.shape, -jnp.inf, out_ref.dtype)

    x = x_ref[0]                                       # (TN, 3)    f32
    h = _relu(_k3_layer(x, c1w, c1b))                  # (TN, 64)   VPU, exact f32
    h = _relu(_dot_bf16(h, c2w) + c2b[...])            # (TN, 128)  MXU bf16, f32 bias/relu
    h = _dot_bf16(h, c3w)                              # (TN, 1024) raw MXU out (bias+relu hoisted)

    def _acc(tile_h):
        out_ref[0] = jnp.maximum(out_ref[0], jnp.max(tile_h, axis=0, keepdims=True))

    rem = n_points % tile_n
    if rem == 0:
        _acc(h)                                        # full tiles: no mask at all
    else:
        last = pl.num_programs(1) - 1

        @pl.when(n != last)
        def _():
            _acc(h)

        @pl.when(n == last)                            # only the partial last tile pays the mask
        def _():
            row = jax.lax.broadcasted_iota(jnp.int32, (tile_n, 1), 0)
            _acc(jnp.where(row < rem, h, -jnp.inf))


# ---------------------------------------------------------------------------
# Kernel B: feature branch on batch 0 only.  trans is pre-folded into conv1's weight,
# conv3 is hoisted to XLA, so the kernel is conv1(VPU) -> conv2(MXU) -> running SUM of the
# (TN,128) activation into a lane-dense (1,1,128) resident output block.
# ---------------------------------------------------------------------------
def _pointfeat_kernel(x_ref, w1, b1, w2, b2, out_ref, *, n_points, tile_n):
    n = pl.program_id(0)

    @pl.when(n == 0)
    def _():
        out_ref[...] = jnp.zeros(out_ref.shape, out_ref.dtype)

    x = x_ref[0]                                       # (TN, 3)   f32
    h = _relu(_k3_layer(x, w1, b1))                    # (TN, 64)  conv1 with trans pre-folded
    h = _relu(_dot_bf16(h, w2) + b2[...])              # (TN, 128) conv2 (conv3 hoisted to XLA)

    def _acc(tile_h):
        out_ref[0] = out_ref[0] + jnp.sum(tile_h, axis=0, keepdims=True)

    rem = n_points % tile_n
    if rem == 0:
        _acc(h)
    else:
        last = pl.num_programs(0) - 1

        @pl.when(n != last)
        def _():
            _acc(h)

        @pl.when(n == last)
        def _():
            row = jax.lax.broadcasted_iota(jnp.int32, (tile_n, 1), 0)
            _acc(jnp.where(row < rem, h, 0.0))


def _const_spec(arr):
    """Weights / biases: same full block every grid step."""
    nd = arr.ndim
    return pl.BlockSpec(arr.shape, lambda *_, _nd=nd: (0,) * _nd)


def _choose_tile(n):
    # Block rule: second-to-last block dim must be a multiple of 8 or equal the full dim.
    return n if n <= _TILE_N else _TILE_N


# ---------------------------------------------------------------------------
# STN3d forward: Pallas point MLP + max-pool, then bias/ReLU finalize and the FC head in XLA.
# ---------------------------------------------------------------------------
def stn_trans(x_bn3, p):
    B, N, _ = x_bn3.shape
    tn = _choose_tile(N)
    n_tiles = pl.cdiv(N, tn)

    stn_args = [x_bn3,
                p["stn_c1_w"], p["stn_c1_b"],
                p["stn_c2_w_bf16"], p["stn_c2_b"],
                p["stn_c3_w_bf16"]]
    pooled = pl.pallas_call(
        functools.partial(_stn_pointmlp_kernel, n_points=N, tile_n=tn),
        grid=(B, n_tiles),
        in_specs=[pl.BlockSpec((1, tn, 3), lambda b, n: (b, n, 0))]
                 + [_const_spec(a) for a in stn_args[1:]],
        out_specs=pl.BlockSpec((1, 1, 1024), lambda b, n: (b, 0, 0)),
        out_shape=jax.ShapeDtypeStruct((B, 1, 1024), jnp.float32),
        compiler_params=pltpu.CompilerParams(
            dimension_semantics=("parallel", "arbitrary"),
            vmem_limit_bytes=_VMEM_LIMIT),
    )(*stn_args)

    # Hoisted conv3 bias + ReLU: exact, since a per-channel bias commutes with the max over
    # points and ReLU is monotone.  Applied once per batch instead of once per tile.
    feat = jax.nn.relu(pooled.reshape(B, 1024) + p["stn_c3_b"])

    # FC head 1024->512->256->9 (+identity), batched across B in XLA.
    f = jax.nn.relu(feat @ p["stn_f1_w"] + p["stn_f1_b"])
    f = jax.nn.relu(f @ p["stn_f2_w"] + p["stn_f2_b"])
    f = f @ p["stn_f3_w"] + p["stn_f3_b"]
    iden = jnp.array([1., 0., 0., 0., 1., 0., 0., 0., 1.], dtype=jnp.float32)
    return (f + iden[None, :]).reshape(B, 3, 3)


def pointnetfeat_forward(x_bcn, p):
    """x_bcn: (B, 3, N) float32, PyTorch NCW layout.  Returns (1, 64), matching
    `torch.mean(x, 2, keepdim=True)[0].view(-1, 64)` of the reference module."""
    B, C, N = x_bcn.shape
    assert C == 3
    x = jnp.transpose(x_bcn, (0, 2, 1)).astype(jnp.float32)     # (B, N, 3): channels on lanes

    trans = stn_trans(x, p)                                     # (B, 3, 3)

    # Only batch 0 reaches the module output (`[0]` indexes the batch axis of the mean).
    # Fold trans into conv1's weight: relu((x @ T) @ W1 + b1) == relu(x @ (T @ W1) + b1).
    w1_eff = trans[0] @ p["c1_w"]                               # (3, 64), f32 in XLA

    tn = _choose_tile(N)
    n_tiles = pl.cdiv(N, tn)
    pf_args = [x[0:1], w1_eff, p["c1_b"], p["c2_w_bf16"], p["c2_b"]]
    h2_sum = pl.pallas_call(
        functools.partial(_pointfeat_kernel, n_points=N, tile_n=tn),
        grid=(n_tiles,),
        in_specs=[pl.BlockSpec((1, tn, 3), lambda n: (0, n, 0))]
                 + [_const_spec(a) for a in pf_args[1:]],
        out_specs=pl.BlockSpec((1, 1, 128), lambda n: (0, 0, 0)),
        out_shape=jax.ShapeDtypeStruct((1, 1, 128), jnp.float32),
        compiler_params=pltpu.CompilerParams(
            dimension_semantics=("arbitrary",),
            vmem_limit_bytes=_VMEM_LIMIT),
    )(*pf_args)

    # Hoisted conv3: the mean over points commutes with a linear layer, so apply it once to
    # the mean activation.  Bias added once (not per tile), no ReLU on conv3 (matches module).
    h2_mean = h2_sum.reshape(1, 128) * (1.0 / N)
    return h2_mean @ p["c3_w"] + p["c3_b"]                      # (1, 64)


# ---------------------------------------------------------------------------
# Deterministic parameter init (shapes from the module __init__).
# Weight layout: (C_in, C_out); biases stored as (1, C_out).
# ---------------------------------------------------------------------------
def init_params(key):
    shapes = {
        "stn_c1_w": (3, 64),     "stn_c1_b": (1, 64),
        "stn_c2_w": (64, 128),   "stn_c2_b": (1, 128),
        "stn_c3_w": (128, 1024), "stn_c3_b": (1, 1024),
        "stn_f1_w": (1024, 512), "stn_f1_b": (1, 512),
        "stn_f2_w": (512, 256),  "stn_f2_b": (1, 256),
        "stn_f3_w": (256, 9),    "stn_f3_b": (1, 9),
        "c1_w": (3, 64),    "c1_b": (1, 64),
        "c2_w": (64, 128),  "c2_b": (1, 128),
        "c3_w": (128, 64),  "c3_b": (1, 64),
    }
    keys = jax.random.split(key, len(shapes))
    params = {}
    for k_, (name, shape) in zip(keys, shapes.items()):
        params[name] = 0.1 * jax.random.normal(k_, shape, dtype=jnp.float32)
    return params


def prepare_params(p):
    """Pre-cast the MXU weights to bf16 once (instead of per call)."""
    q = dict(p)
    for name in ("stn_c2_w", "stn_c3_w", "c2_w"):
        q[name + "_bf16"] = p[name].astype(jnp.bfloat16)
    return q


# Pure-JAX f32 reference (same math, no Pallas, no bf16) for a sanity check.
def pointnetfeat_reference(x_bcn, p):
    x = jnp.transpose(x_bcn, (0, 2, 1)).astype(jnp.float32)   # (B, N, 3)
    relu = jax.nn.relu
    h = relu(x @ p["stn_c1_w"] + p["stn_c1_b"])
    h = relu(h @ p["stn_c2_w"] + p["stn_c2_b"])
    h = relu(h @ p["stn_c3_w"] + p["stn_c3_b"])
    feat = jnp.max(h, axis=1)                                 # (B, 1024)
    f = relu(feat @ p["stn_f1_w"] + p["stn_f1_b"])
    f = relu(f @ p["stn_f2_w"] + p["stn_f2_b"])
    f = f @ p["stn_f3_w"] + p["stn_f3_b"]
    iden = jnp.array([1., 0., 0., 0., 1., 0., 0., 0., 1.], dtype=jnp.float32)[None]
    trans = (f + iden).reshape(-1, 3, 3)
    xt = jnp.einsum("bnc,bcd->bnd", x, trans)
    h = relu(xt @ p["c1_w"] + p["c1_b"])
    h = relu(h @ p["c2_w"] + p["c2_b"])
    h = h @ p["c3_w"] + p["c3_b"]                             # (B, N, 64)
    m = jnp.mean(h, axis=1)                                   # (B, 64)
    return m[0:1, :]                                          # torch.mean(...)[0].view(-1, 64)


if __name__ == "__main__":
    key = jax.random.PRNGKey(0)
    pkey, xkey = jax.random.split(key)
    params = prepare_params(init_params(pkey))

    B, N = 2, 16
    x = jax.random.normal(xkey, (B, 3, N), dtype=jnp.float32)  # PyTorch NCW input

    fwd = jax.jit(pointnetfeat_forward)
    out = jax.block_until_ready(fwd(x, params))

    ref = pointnetfeat_reference(x, params)
    assert out.shape == (1, 64), out.shape
    # Wide layers run bf16 on the MXU (f32 accumulation); compare against the exact-f32
    # reference at a tolerance consistent with bf16 operands (STN trans error compounds into
    # the feature branch, still well inside 2e-2 at these scales).
    np.testing.assert_allclose(np.asarray(out), np.asarray(ref), rtol=2e-2, atol=2e-2)

    print("KERNEL_OK")
</pallas_src>

<mosaic_0001>
module attributes {stable_mosaic.version = 11 : i64} {
  func.func @_stn_pointmlp_kernel(%arg0: i32, %arg1: i32, %arg2: memref<1x16x3xf32, #tpu.memory_space<vmem>>, %arg3: memref<3x64xf32, #tpu.memory_space<vmem>>, %arg4: memref<1x64xf32, #tpu.memory_space<vmem>>, %arg5: memref<64x128xbf16, #tpu.memory_space<vmem>>, %arg6: memref<1x128xf32, #tpu.memory_space<vmem>>, %arg7: memref<128x1024xbf16, #tpu.memory_space<vmem>>, %arg8: memref<1x1x1024xf32, #tpu.memory_space<vmem>>) attributes {dimension_semantics = [#tpu.dimension_semantics<parallel>, #tpu.dimension_semantics<arbitrary>], iteration_bounds = array<i64: 2, 1>, scalar_prefetch = 0 : i64, scratch_operands = 0 : i64, tpu.core_type = #tpu.core_type<tc>, window_params = [{transform_indices = @transform_0, window_bounds = array<i64: 1, 16, 3>}, {pipeline_mode = #tpu.pipeline_mode<synchronous>, transform_indices = @transform_1, window_bounds = array<i64: 3, 64>}, {pipeline_mode = #tpu.pipeline_mode<synchronous>, transform_indices = @transform_2, window_bounds = array<i64: 1, 64>}, {pipeline_mode = #tpu.pipeline_mode<synchronous>, transform_indices = @transform_3, window_bounds = array<i64: 64, 128>}, {pipeline_mode = #tpu.pipeline_mode<synchronous>, transform_indices = @transform_4, window_bounds = array<i64: 1, 128>}, {pipeline_mode = #tpu.pipeline_mode<synchronous>, transform_indices = @transform_5, window_bounds = array<i64: 128, 1024>}, {transform_indices = @transform_6, window_bounds = array<i64: 1, 1, 1024>}]} {
    %c0_i32 = arith.constant 0 : i32
    %0 = arith.cmpi eq, %arg1, %c0_i32 : i32
    %1 = arith.extui %0 : i1 to i32
    %c0_i32_0 = arith.constant 0 : i32
    %2 = arith.cmpi ne, %1, %c0_i32_0 : i32
    scf.if %2 {
      %cst_25 = arith.constant 0xFF800000 : f32
      %46 = vector.broadcast %cst_25 : f32 to vector<1x1x1024xf32>
      %c0_26 = arith.constant 0 : index
      %c0_27 = arith.constant 0 : index
      %c0_28 = arith.constant 0 : index
      %47 = vector.load %arg8[%c0_26, %c0_27, %c0_28] : memref<1x1x1024xf32, #tpu.memory_space<vmem>>, vector<1x1x1024xf32>
      tpu.vector_store %arg8[%c0_26, %c0_27, %c0_28], %46 {strides = array<i32>} : memref<1x1x1024xf32, #tpu.memory_space<vmem>>, vector<1x1x1024xf32>,
    } else {
    }
    %c0 = arith.constant 0 : index
    %c0_1 = arith.constant 0 : index
    %c0_2 = arith.constant 0 : index
    %3 = vector.load %arg2[%c0, %c0_1, %c0_2] : memref<1x16x3xf32, #tpu.memory_space<vmem>>, vector<1x16x3xf32>
    %4 = vector.shape_cast %3 : vector<1x16x3xf32> to vector<16x3xf32>
    %5 = vector.extract_strided_slice %4 {offsets = [0, 0], sizes = [16, 1], strides = [1, 1]} : vector<16x3xf32> to vector<16x1xf32>
    %c0_3 = arith.constant 0 : index
    %c0_4 = arith.constant 0 : index
    %6 = vector.load %arg3[%c0_3, %c0_4] : memref<3x64xf32, #tpu.memory_space<vmem>>, vector<1x64xf32>
    %7 = vector.broadcast %5 : vector<16x1xf32> to vector<16x64xf32>
    %8 = vector.broadcast %6 : vector<1x64xf32> to vector<16x64xf32>
    %9 = arith.mulf %7, %8 : vector<16x64xf32>
    %10 = vector.extract_strided_slice %4 {offsets = [0, 1], sizes = [16, 1], strides = [1, 1]} : vector<16x3xf32> to vector<16x1xf32>
    %c1 = arith.constant 1 : index
    %c0_5 = arith.constant 0 : index
    %11 = vector.load %arg3[%c1, %c0_5] : memref<3x64xf32, #tpu.memory_space<vmem>>, vector<1x64xf32>
    %12 = vector.broadcast %10 : vector<16x1xf32> to vector<16x64xf32>
    %13 = vector.broadcast %11 : vector<1x64xf32> to vector<16x64xf32>
    %14 = arith.mulf %12, %13 : vector<16x64xf32>
    %15 = arith.addf %9, %14 : vector<16x64xf32>
    %16 = vector.extract_strided_slice %4 {offsets = [0, 2], sizes = [16, 1], strides = [1, 1]} : vector<16x3xf32> to vector<16x1xf32>
    %c2 = arith.constant 2 : index
    %c0_6 = arith.constant 0 : index
    %17 = vector.load %arg3[%c2, %c0_6] : memref<3x64xf32, #tpu.memory_space<vmem>>, vector<1x64xf32>
    %18 = vector.broadcast %16 : vector<16x1xf32> to vector<16x64xf32>
    %19 = vector.broadcast %17 : vector<1x64xf32> to vector<16x64xf32>
    %20 = arith.mulf %18, %19 : vector<16x64xf32>
    %21 = arith.addf %15, %20 : vector<16x64xf32>
    %c0_7 = arith.constant 0 : index
    %c0_8 = arith.constant 0 : index
    %22 = vector.load %arg4[%c0_7, %c0_8] : memref<1x64xf32, #tpu.memory_space<vmem>>, vector<1x64xf32>
    %23 = vector.broadcast %22 : vector<1x64xf32> to vector<16x64xf32>
    %24 = arith.addf %21, %23 : vector<16x64xf32>
    %cst = arith.constant 0.000000e+00 : f32
    %25 = vector.broadcast %cst : f32 to vector<16x64xf32>
    %26 = arith.maximumf %24, %25 : vector<16x64xf32>
    %27 = arith.truncf %26 : vector<16x64xf32> to vector<16x64xbf16>
    %c0_9 = arith.constant 0 : index
    %c0_10 = arith.constant 0 : index
    %28 = vector.load %arg5[%c0_9, %c0_10] : memref<64x128xbf16, #tpu.memory_space<vmem>>, vector<64x128xbf16>
    %cst_11 = arith.constant dense<0.000000e+00> : vector<16x128xf32>
    %29 = tpu.matmul %27, %28, %cst_11 {dimension_numbers = #tpu.dot_dimension_numbers<[1], [0], [0], [1], [0, 0, 1, 1], [], []>} : vector<16x64xbf16>, vector<64x128xbf16>, vector<16x128xf32> -> vector<16x128xf32>
    %c0_12 = arith.constant 0 : index
    %c0_13 = arith.constant 0 : index
    %30 = vector.load %arg6[%c0_12, %c0_13] : memref<1x128xf32, #tpu.memory_space<vmem>>, vector<1x128xf32>
    %31 = vector.broadcast %30 : vector<1x128xf32> to vector<16x128xf32>
    %32 = arith.addf %29, %31 : vector<16x128xf32>
    %cst_14 = arith.constant 0.000000e+00 : f32
    %33 = vector.broadcast %cst_14 : f32 to vector<16x128xf32>
    %34 = arith.maximumf %32, %33 : vector<16x128xf32>
    %35 = arith.truncf %34 : vector<16x128xf32> to vector<16x128xbf16>
    %c0_15 = arith.constant 0 : index
    %c0_16 = arith.constant 0 : index
    %36 = vector.load %arg7[%c0_15, %c0_16] : memref<128x1024xbf16, #tpu.memory_space<vmem>>, vector<128x1024xbf16>
    %cst_17 = arith.constant dense<0.000000e+00> : vector<16x1024xf32>
    %37 = tpu.matmul %35, %36, %cst_17 {dimension_numbers = #tpu.dot_dimension_numbers<[1], [0], [0], [1], [0, 0, 1, 1], [], []>} : vector<16x128xbf16>, vector<128x1024xbf16>, vector<16x1024xf32> -> vector<16x1024xf32>
    %c0_18 = arith.constant 0 : index
    %c0_19 = arith.constant 0 : index
    %c0_20 = arith.constant 0 : index
    %38 = vector.load %arg8[%c0_18, %c0_19, %c0_20] : memref<1x1x1024xf32, #tpu.memory_space<vmem>>, vector<1x1x1024xf32>
    %39 = vector.shape_cast %38 : vector<1x1x1024xf32> to vector<1x1024xf32>
    %cst_21 = arith.constant dense<0xFF800000> : vector<1024xf32>
    %40 = vector.multi_reduction <maximumf>, %37, %cst_21 [0] : vector<16x1024xf32> to vector<1024xf32>
    %41 = vector.shape_cast %40 : vector<1024xf32> to vector<1x1024xf32>
    %42 = arith.maximumf %39, %41 : vector<1x1024xf32>
    %c0_22 = arith.constant 0 : index
    %c0_23 = arith.constant 0 : index
    %c0_24 = arith.constant 0 : index
    %43 = vector.load %arg8[%c0_22, %c0_23, %c0_24] : memref<1x1x1024xf32, #tpu.memory_space<vmem>>, vector<1x1x1024xf32>
    %44 = vector.shape_cast %43 : vector<1x1x1024xf32> to vector<1x1024xf32>
    %45 = vector.shape_cast %42 : vector<1x1024xf32> to vector<1x1x1024xf32>
    tpu.vector_store %arg8[%c0_22, %c0_23, %c0_24], %45 {strides = array<i32>} : memref<1x1x1024xf32, #tpu.memory_space<vmem>>, vector<1x1x1024xf32>,
    return
  }
  func.func @transform_0(%arg0: i32, %arg1: i32) -> (i32, i32, i32) {
    %c0_i32 = arith.constant 0 : i32
    %c0_i32_0 = arith.constant 0 : i32
    return %arg0, %arg1, %c0_i32 : i32, i32, i32
  }
  func.func @transform_1(%arg0: i32, %arg1: i32) -> (i32, i32) {
    %c0_i32 = arith.constant 0 : i32
    %c0_i32_0 = arith.constant 0 : i32
    %c0_i32_1 = arith.constant 0 : i32
    return %c0_i32, %c0_i32_0 : i32, i32
  }
  func.func @transform_2(%arg0: i32, %arg1: i32) -> (i32, i32) {
    %c0_i32 = arith.constant 0 : i32
    %c0_i32_0 = arith.constant 0 : i32
    %c0_i32_1 = arith.constant 0 : i32
    return %c0_i32, %c0_i32_0 : i32, i32
  }
  func.func @transform_3(%arg0: i32, %arg1: i32) -> (i32, i32) {
    %c0_i32 = arith.constant 0 : i32
    %c0_i32_0 = arith.constant 0 : i32
    %c0_i32_1 = arith.constant 0 : i32
    return %c0_i32, %c0_i32_0 : i32, i32
  }
  func.func @transform_4(%arg0: i32, %arg1: i32) -> (i32, i32) {
    %c0_i32 = arith.constant 0 : i32
    %c0_i32_0 = arith.constant 0 : i32
    %c0_i32_1 = arith.constant 0 : i32
    return %c0_i32, %c0_i32_0 : i32, i32
  }
  func.func @transform_5(%arg0: i32, %arg1: i32) -> (i32, i32) {
    %c0_i32 = arith.constant 0 : i32
    %c0_i32_0 = arith.constant 0 : i32
    %c0_i32_1 = arith.constant 0 : i32
    return %c0_i32, %c0_i32_0 : i32, i32
  }
  func.func @transform_6(%arg0: i32, %arg1: i32) -> (i32, i32, i32) {
    %c0_i32 = arith.constant 0 : i32
    %c0_i32_0 = arith.constant 0 : i32
    %c0_i32_1 = arith.constant 0 : i32
    return %arg0, %c0_i32, %c0_i32_0 : i32, i32, i32
  }
}

module attributes {stable_mosaic.version = 11 : i64} {
  func.func @_pointfeat_kernel(%arg0: i32, %arg1: memref<1x16x3xf32, #tpu.memory_space<vmem>>, %arg2: memref<3x64xf32, #tpu.memory_space<vmem>>, %arg3: memref<1x64xf32, #tpu.memory_space<vmem>>, %arg4: memref<64x128xbf16, #tpu.memory_space<vmem>>, %arg5: memref<1x128xf32, #tpu.memory_space<vmem>>, %arg6: memref<1x1x128xf32, #tpu.memory_space<vmem>>) attributes {dimension_semantics = [#tpu.dimension_semantics<arbitrary>], iteration_bounds = array<i64: 1>, scalar_prefetch = 0 : i64, scratch_operands = 0 : i64, tpu.core_type = #tpu.core_type<tc>, window_params = [{transform_indices = @transform_0, window_bounds = array<i64: 1, 16, 3>}, {pipeline_mode = #tpu.pipeline_mode<synchronous>, transform_indices = @transform_1, window_bounds = array<i64: 3, 64>}, {pipeline_mode = #tpu.pipeline_mode<synchronous>, transform_indices = @transform_2, window_bounds = array<i64: 1, 64>}, {pipeline_mode = #tpu.pipeline_mode<synchronous>, transform_indices = @transform_3, window_bounds = array<i64: 64, 128>}, {pipeline_mode = #tpu.pipeline_mode<synchronous>, transform_indices = @transform_4, window_bounds = array<i64: 1, 128>}, {pipeline_mode = #tpu.pipeline_mode<synchronous>, transform_indices = @transform_5, window_bounds = array<i64: 1, 1, 128>}]} {
    %c0_i32 = arith.constant 0 : i32
    %0 = arith.cmpi eq, %arg0, %c0_i32 : i32
    %1 = arith.extui %0 : i1 to i32
    %c0_i32_0 = arith.constant 0 : i32
    %2 = arith.cmpi ne, %1, %c0_i32_0 : i32
    scf.if %2 {
      %cst_22 = arith.constant 0.000000e+00 : f32
      %43 = vector.broadcast %cst_22 : f32 to vector<1x1x128xf32>
      %c0_23 = arith.constant 0 : index
      %c0_24 = arith.constant 0 : index
      %c0_25 = arith.constant 0 : index
      %44 = vector.load %arg6[%c0_23, %c0_24, %c0_25] : memref<1x1x128xf32, #tpu.memory_space<vmem>>, vector<1x1x128xf32>
      tpu.vector_store %arg6[%c0_23, %c0_24, %c0_25], %43 {strides = array<i32>} : memref<1x1x128xf32, #tpu.memory_space<vmem>>, vector<1x1x128xf32>,
    } else {
    }
    %c0 = arith.constant 0 : index
    %c0_1 = arith.constant 0 : index
    %c0_2 = arith.constant 0 : index
    %3 = vector.load %arg1[%c0, %c0_1, %c0_2] : memref<1x16x3xf32, #tpu.memory_space<vmem>>, vector<1x16x3xf32>
    %4 = vector.shape_cast %3 : vector<1x16x3xf32> to vector<16x3xf32>
    %5 = vector.extract_strided_slice %4 {offsets = [0, 0], sizes = [16, 1], strides = [1, 1]} : vector<16x3xf32> to vector<16x1xf32>
    %c0_3 = arith.constant 0 : index
    %c0_4 = arith.constant 0 : index
    %6 = vector.load %arg2[%c0_3, %c0_4] : memref<3x64xf32, #tpu.memory_space<vmem>>, vector<1x64xf32>
    %7 = vector.broadcast %5 : vector<16x1xf32> to vector<16x64xf32>
    %8 = vector.broadcast %6 : vector<1x64xf32> to vector<16x64xf32>
    %9 = arith.mulf %7, %8 : vector<16x64xf32>
    %10 = vector.extract_strided_slice %4 {offsets = [0, 1], sizes = [16, 1], strides = [1, 1]} : vector<16x3xf32> to vector<16x1xf32>
    %c1 = arith.constant 1 : index
    %c0_5 = arith.constant 0 : index
    %11 = vector.load %arg2[%c1, %c0_5] : memref<3x64xf32, #tpu.memory_space<vmem>>, vector<1x64xf32>
    %12 = vector.broadcast %10 : vector<16x1xf32> to vector<16x64xf32>
    %13 = vector.broadcast %11 : vector<1x64xf32> to vector<16x64xf32>
    %14 = arith.mulf %12, %13 : vector<16x64xf32>
    %15 = arith.addf %9, %14 : vector<16x64xf32>
    %16 = vector.extract_strided_slice %4 {offsets = [0, 2], sizes = [16, 1], strides = [1, 1]} : vector<16x3xf32> to vector<16x1xf32>
    %c2 = arith.constant 2 : index
    %c0_6 = arith.constant 0 : index
    %17 = vector.load %arg2[%c2, %c0_6] : memref<3x64xf32, #tpu.memory_space<vmem>>, vector<1x64xf32>
    %18 = vector.broadcast %16 : vector<16x1xf32> to vector<16x64xf32>
    %19 = vector.broadcast %17 : vector<1x64xf32> to vector<16x64xf32>
    %20 = arith.mulf %18, %19 : vector<16x64xf32>
    %21 = arith.addf %15, %20 : vector<16x64xf32>
    %c0_7 = arith.constant 0 : index
    %c0_8 = arith.constant 0 : index
    %22 = vector.load %arg3[%c0_7, %c0_8] : memref<1x64xf32, #tpu.memory_space<vmem>>, vector<1x64xf32>
    %23 = vector.broadcast %22 : vector<1x64xf32> to vector<16x64xf32>
    %24 = arith.addf %21, %23 : vector<16x64xf32>
    %cst = arith.constant 0.000000e+00 : f32
    %25 = vector.broadcast %cst : f32 to vector<16x64xf32>
    %26 = arith.maximumf %24, %25 : vector<16x64xf32>
    %27 = arith.truncf %26 : vector<16x64xf32> to vector<16x64xbf16>
    %c0_9 = arith.constant 0 : index
    %c0_10 = arith.constant 0 : index
    %28 = vector.load %arg4[%c0_9, %c0_10] : memref<64x128xbf16, #tpu.memory_space<vmem>>, vector<64x128xbf16>
    %cst_11 = arith.constant dense<0.000000e+00> : vector<16x128xf32>
    %29 = tpu.matmul %27, %28, %cst_11 {dimension_numbers = #tpu.dot_dimension_numbers<[1], [0], [0], [1], [0, 0, 1, 1], [], []>} : vector<16x64xbf16>, vector<64x128xbf16>, vector<16x128xf32> -> vector<16x128xf32>
    %c0_12 = arith.constant 0 : index
    %c0_13 = arith.constant 0 : index
    %30 = vector.load %arg5[%c0_12, %c0_13] : memref<1x128xf32, #tpu.memory_space<vmem>>, vector<1x128xf32>
    %31 = vector.broadcast %30 : vector<1x128xf32> to vector<16x128xf32>
    %32 = arith.addf %29, %31 : vector<16x128xf32>
    %cst_14 = arith.constant 0.000000e+00 : f32
    %33 = vector.broadcast %cst_14 : f32 to vector<16x128xf32>
    %34 = arith.maximumf %32, %33 : vector<16x128xf32>
    %c0_15 = arith.constant 0 : index
    %c0_16 = arith.constant 0 : index
    %c0_17 = arith.constant 0 : index
    %35 = vector.load %arg6[%c0_15, %c0_16, %c0_17] : memref<1x1x128xf32, #tpu.memory_space<vmem>>, vector<1x1x128xf32>
    %36 = vector.shape_cast %35 : vector<1x1x128xf32> to vector<1x128xf32>
    %cst_18 = arith.constant dense<0.000000e+00> : vector<128xf32>
    %37 = vector.multi_reduction <add>, %34, %cst_18 [0] : vector<16x128xf32> to vector<128xf32>
    %38 = vector.shape_cast %37 : vector<128xf32> to vector<1x128xf32>
    %39 = arith.addf %36, %38 : vector<1x128xf32>
    %c0_19 = arith.constant 0 : index
    %c0_20 = arith.constant 0 : index
    %c0_21 = arith.constant 0 : index
    %40 = vector.load %arg6[%c0_19, %c0_20, %c0_21] : memref<1x1x128xf32, #tpu.memory_space<vmem>>, vector<1x1x128xf32>
    %41 = vector.shape_cast %40 : vector<1x1x128xf32> to vector<1x128xf32>
    %42 = vector.shape_cast %39 : vector<1x128xf32> to vector<1x1x128xf32>
    tpu.vector_store %arg6[%c0_19, %c0_20, %c0_21], %42 {strides = array<i32>} : memref<1x1x128xf32, #tpu.memory_space<vmem>>, vector<1x1x128xf32>,
    return
  }
  func.func @transform_0(%arg0: i32) -> (i32, i32, i32) {
    %c0_i32 = arith.constant 0 : i32
    %c0_i32_0 = arith.constant 0 : i32
    %c0_i32_1 = arith.constant 0 : i32
    return %c0_i32, %arg0, %c0_i32_0 : i32, i32, i32
  }
  func.func @transform_1(%arg0: i32) -> (i32, i32) {
    %c0_i32 = arith.constant 0 : i32
    %c0_i32_0 = arith.constant 0 : i32
    %c0_i32_1 = arith.constant 0 : i32
    return %c0_i32, %c0_i32_0 : i32, i32
  }
  func.func @transform_2(%arg0: i32) -> (i32, i32) {
    %c0_i32 = arith.constant 0 : i32
    %c0_i32_0 = arith.constant 0 : i32
    %c0_i32_1 = arith.constant 0 : i32
    return %c0_i32, %c0_i32_0 : i32, i32
  }
  func.func @transform_3(%arg0: i32) -> (i32, i32) {
    %c0_i32 = arith.constant 0 : i32
    %c0_i32_0 = arith.constant 0 : i32
    %c0_i32_1 = arith.constant 0 : i32
    return %c0_i32, %c0_i32_0 : i32, i32
  }
  func.func @transform_4(%arg0: i32) -> (i32, i32) {
    %c0_i32 = arith.constant 0 : i32
    %c0_i32_0 = arith.constant 0 : i32
    %c0_i32_1 = arith.constant 0 : i32
    return %c0_i32, %c0_i32_0 : i32, i32
  }
  func.func @transform_5(%arg0: i32) -> (i32, i32, i32) {
    %c0_i32 = arith.constant 0 : i32
    %c0_i32_0 = arith.constant 0 : i32
    %c0_i32_1 = arith.constant 0 : i32
    %c0_i32_2 = arith.constant 0 : i32
    return %c0_i32, %c0_i32_0, %c0_i32_1 : i32, i32, i32
  }
}

</mosaic_0001>

<llo_original>
// kernel: squeeze.1
$region0: #{squeeze.1}
  %s0 = inlined_call_operand.vmem [shape: f32[9], index: 0, kind: input, shape index: {}]
  %s1 = inlined_call_operand.vmem [shape: f32[3,3], index: 1, kind: output, shape index: {}]
  $region1: #{squeeze.1} parent=0
    #allocation0 [shape = 'u8[4096]{0}', space=vmem, size = 0x1000, scoped, tag = 'scoped mem for output reshape']
    #allocation1 [shape = 'u8[4096]{0}', space=vmem, size = 0x1000, scoped, tag = 'scoped mem for input reshape']
    %s3 = sshllo.u32 0, 1
    %v4 = vld [vmem:[%s0] sm:%s3]
    %5 = vst [vmem:[#allocation1] sm:%s3] %v4
    %v6 = vld [vmem:[#allocation1] sm:$0x1]
    %vm7 = vcmask 23552
    %8 = vst.msk [vmem:[#allocation0] sm:$0x1] %vm7, %v6
    %v9 = vld [vmem:[#allocation1] sm:$0x1]
    %10 = vrot.lane.b32.xlu0 %v9, 125
    %v11 = vpop.permute.xlu0 %10
    %vm12 = vcmask 23552
    %s13 = scalar_lea.vmem [#allocation0], 1
    %14 = vst.msk [vmem:[%s13] sm:$0x1] %vm12, %v11
    %v15 = vld [vmem:[#allocation1] sm:$0x1]
    %16 = vrot.lane.b32.xlu0 %v15, 122
    %v17 = vpop.permute.xlu0 %16
    %vm18 = vcmask 23552
    %s19 = scalar_lea.vmem [#allocation0], 2
    %20 = vst.msk [vmem:[%s19] sm:$0x1] %vm18, %v17
    %s22 = sshllo.u32 0, 4
    %v24 = vld [vmem:[#allocation0] sm:%s22]
    %s25 = sshllo.u32 0, 4
    %26 = vst [vmem:[%s1] sm:%s25] %v24

// kernel: pointnetfeat_forward.2
$region0: #{pointnetfeat_forward.2}
  #allocation0 [shape = 'u32[]', space=smem, size = 0x4, offset = 0x4, fixed_abs, tag = 'smem constant byte address 0x4 - core index']
  #allocation1 [shape = 'u32[144,128]{1,0:T(1,128)}', space=vmem, size = 0x12000, scoped, tag = 'internal scratch']
  %s0 = inlined_call_operand.vmem [shape: f32[2,16,3], index: 0, kind: input, shape index: {}]
  %s1 = inlined_call_operand.hbm [shape: f32[3,64], index: 1, kind: input, shape index: {}]
  %s2 = inlined_call_operand.hbm [shape: f32[1,64], index: 2, kind: input, shape index: {}]
  %s3 = inlined_call_operand.hbm [shape: bf16[64,128], index: 3, kind: input, shape index: {}]
  %s4 = inlined_call_operand.hbm [shape: f32[1,128], index: 4, kind: input, shape index: {}]
  %s5 = inlined_call_operand.hbm [shape: bf16[128,1024], index: 5, kind: input, shape index: {}]
  %s6 = inlined_call_operand.vmem [shape: f32[2,1,1024], index: 6, kind: output, shape index: {}]
  %s7 = sld [smem:[#allocation0]]
  $region81: #{pointnetfeat_forward.2} parent=0
    _
  %s9 = ssub.s32 1, %s7
  %s10 = scalar_select 0, %s9, %s7
  $region1: #{pointnetfeat_forward.2} parent=0
    #allocation2 [shape = 'u8[2048]{0}', space=vmem, size = 0x800, scoped, tag = 'input window, operand 1, single buffered']
    #allocation3 [shape = 's32[2]{0}', space=sflag, size = 0x8, scoped, tag = 'scoped memory for pointnetfeat_forward.2']
    #allocation4 [shape = 'u8[512]{0}', space=vmem, size = 0x400, scoped, tag = 'input window, operand 2, single buffered']
    #allocation5 [shape = 's32[1]{0}', space=sflag, size = 0x4, scoped, tag = 'scoped memory for pointnetfeat_forward.2']
    #allocation6 [shape = 'u8[16384]{0}', space=vmem, size = 0x4000, scoped, tag = 'input window, operand 3, single buffered']
    #allocation7 [shape = 'u8[512]{0}', space=vmem, size = 0x400, scoped, tag = 'input window, operand 4, single buffered']
    #allocation8 [shape = 's32[1]{0}', space=sflag, size = 0x4, scoped, tag = 'scoped memory for pointnetfeat_forward.2']
    #allocation9 [shape = 'u8[262144]{0}', space=vmem, size = 0x40000, scoped, tag = 'input window, operand 5, single buffered']
    %11 = vsyncpa [#allocation3], 0
    %12 = vsyncpa [#allocation5], 0
    %13 = vsyncpa [#allocation8], 0
    loop: start=0, step=1, limit=4
    $region2: #{pointnetfeat_forward.2} parent=1 // loop_pre_header
      _
    $region3: #{pointnetfeat_forward.2} parent=1 // loop_header
      %s15 = sphi 0, %s19
      %p16 = scmp.ge.s32.totalorder %s15, 4
      %s22 = sphi 0, %s34
      %s23 = sphi 0, %s30
      %s24 = sphi 0, %s22
      %s25 = sphi 0, %s23
      %s26 = sphi 0, %s24
      %s27 = sphi 0, %s25
      %s39 = sphi 0, %s41
      %s42 = sphi 0, %s39
      %s43 = sphi 0, %s42
      %s59 = sphi 0, %s43
      %s63 = sphi 0, %s63
      %s65 = sphi 0, %s63
      %s66 = sphi 0, %s65
      %s80 = sphi 0, %s66
      %s84 = sphi 0, %s84
      %s86 = sphi 0, %s84
      %s87 = sphi 0, %s86
      %s101 = sphi 0, %s87
      %s105 = sphi 0, %s105
      %s107 = sphi 0, %s105
      %s108 = sphi 0, %s107
      %s122 = sphi 0, %s108
      %s126 = sphi 0, %s126
      %s128 = sphi 0, %s126
      %s129 = sphi 0, %s128
      %s143 = sphi 0, %s129
      %s147 = sphi 0, %s147
      %s149 = sphi 0, %s147
      %s150 = sphi 0, %s149
      %s164 = sphi 0, %s150
      %s170 = sphi 0, %s172
      %s173 = sphi 0, %s170
      %s174 = sphi 0, %s173
      %s190 = sphi 0, %s174
    $region4: #{pointnetfeat_forward.2} parent=1 // loop_header_branch
      %18 = sbr.rel (%p16) target = $region8
    $region5: #{pointnetfeat_forward.2} parent=1 // loop_body
      %s20 = ssub.s32 %s15, 1
      %s21 = ssub.s32 %s15, 2
      %s28 = sadd.s32 1, %s23
      %p29 = scmp.ge.s32.totalorder %s28, 1
      %s30 = scalar_select %p29, 0, %s28
      %s31 = sadd.s32 1, %s22
      %s32 = scalar_select %p29, %s31, %s22
      %p33 = scmp.ge.s32.totalorder %s32, 2
      %s34 = scalar_select %p33, 0, %s32
      %s35 = ssub.s32 %s22, %s34
      %s36 = ssub.s32 %s23, %s30
      %s37 = sor.u32 %s35, %s36
      %p38 = scmp.eq.s32.totalorder %s37, 0
      %s40 = sadd.s32 %s39, 1
      %s41 = scalar_select %p38, %s39, %s40
      %p44 = pneg %p38
      %p45 = scmp.eq.s32.totalorder %s15, 1
      %p46 = por %p44, %p45
      %p47 = scmp.ne.s32.totalorder %s39, %s42
      %p48 = scmp.eq.s32.totalorder %s15, 0
      %p49 = por %p47, %p48
      %p50 = scmp.ne.s32.totalorder %s39, %s42
      %p51 = scmp.eq.s32.totalorder %s20, 1
      %p52 = por %p50, %p51
      %p53 = scmp.ne.s32.totalorder %s42, %s43
      %p54 = scmp.eq.s32.totalorder %s20, 0
      %p55 = por %p53, %p54
      %p56 = scmp.ne.s32.totalorder %s42, %s43
      %p57 = scmp.eq.s32.totalorder %s21, 1
      %p58 = por %p56, %p57
      %p60 = scmp.ne.s32.totalorder %s43, %s59
      %p61 = scmp.eq.s32.totalorder %s21, 0
      %p62 = por %p60, %p61
      %s64 = sadd.s32 %s63, 1
      %p67 = scmp.eq.s32.totalorder %s15, 1
      %p68 = scmp.ne.s32.totalorder %s63, %s65
      %p69 = scmp.eq.s32.totalorder %s15, 0
      %p70 = por %p68, %p69
      %p71 = scmp.ne.s32.totalorder %s63, %s65
      %p72 = scmp.eq.s32.totalorder %s20, 1
      %p73 = por %p71, %p72
      %p74 = scmp.ne.s32.totalorder %s65, %s66
      %p75 = scmp.eq.s32.totalorder %s20, 0
      %p76 = por %p74, %p75
      %p77 = scmp.ne.s32.totalorder %s65, %s66
      %p78 = scmp.eq.s32.totalorder %s21, 1
      %p79 = por %p77, %p78
      %p81 = scmp.ne.s32.totalorder %s66, %s80
      %p82 = scmp.eq.s32.totalorder %s21, 0
      %p83 = por %p81, %p82
      %s85 = sadd.s32 %s84, 1
      %p88 = scmp.eq.s32.totalorder %s15, 1
      %p89 = scmp.ne.s32.totalorder %s84, %s86
      %p90 = scmp.eq.s32.totalorder %s15, 0
      %p91 = por %p89, %p90
      %p92 = scmp.ne.s32.totalorder %s84, %s86
      %p93 = scmp.eq.s32.totalorder %s20, 1
      %p94 = por %p92, %p93
      %p95 = scmp.ne.s32.totalorder %s86, %s87
      %p96 = scmp.eq.s32.totalorder %s20, 0
      %p97 = por %p95, %p96
      %p98 = scmp.ne.s32.totalorder %s86, %s87
      %p99 = scmp.eq.s32.totalorder %s21, 1
      %p100 = por %p98, %p99
      %p102 = scmp.ne.s32.totalorder %s87, %s101
      %p103 = scmp.eq.s32.totalorder %s21, 0
      %p104 = por %p102, %p103
      %s106 = sadd.s32 %s105, 1
      %p109 = scmp.eq.s32.totalorder %s15, 1
      %p110 = scmp.ne.s32.totalorder %s105, %s107
      %p111 = scmp.eq.s32.totalorder %s15, 0
      %p112 = por %p110, %p111
      %p113 = scmp.ne.s32.totalorder %s105, %s107
      %p114 = scmp.eq.s32.totalorder %s20, 1
      %p115 = por %p113, %p114
      %p116 = scmp.ne.s32.totalorder %s107, %s108
      %p117 = scmp.eq.s32.totalorder %s20, 0
      %p118 = por %p116, %p117
      %p119 = scmp.ne.s32.totalorder %s107, %s108
      %p120 = scmp.eq.s32.totalorder %s21, 1
      %p121 = por %p119, %p120
      %p123 = scmp.ne.s32.totalorder %s108, %s122
      %p124 = scmp.eq.s32.totalorder %s21, 0
      %p125 = por %p123, %p124
      %s127 = sadd.s32 %s126, 1
      %p130 = scmp.eq.s32.totalorder %s15, 1
      %p131 = scmp.ne.s32.totalorder %s126, %s128
      %p132 = scmp.eq.s32.totalorder %s15, 0
      %p133 = por %p131, %p132
      %p134 = scmp.ne.s32.totalorder %s126, %s128
      %p135 = scmp.eq.s32.totalorder %s20, 1
      %p136 = por %p134, %p135
      %p137 = scmp.ne.s32.totalorder %s128, %s129
      %p138 = scmp.eq.s32.totalorder %s20, 0
      %p139 = por %p137, %p138
      %p140 = scmp.ne.s32.totalorder %s128, %s129
      %p141 = scmp.eq.s32.totalorder %s21, 1
      %p142 = por %p140, %p141
      %p144 = scmp.ne.s32.totalorder %s129, %s143
      %p145 = scmp.eq.s32.totalorder %s21, 0
      %p146 = por %p144, %p145
      %s148 = sadd.s32 %s147, 1
      %p151 = scmp.eq.s32.totalorder %s15, 1
      %p152 = scmp.ne.s32.totalorder %s147, %s149
      %p153 = scmp.eq.s32.totalorder %s15, 0
      %p154 = por %p152, %p153
      %p155 = scmp.ne.s32.totalorder %s147, %s149
      %p156 = scmp.eq.s32.totalorder %s20, 1
      %p157 = por %p155, %p156
      %p158 = scmp.ne.s32.totalorder %s149, %s150
      %p159 = scmp.eq.s32.totalorder %s20, 0
      %p160 = por %p158, %p159
      %p161 = scmp.ne.s32.totalorder %s149, %s150
      %p162 = scmp.eq.s32.totalorder %s21, 1
      %p163 = por %p161, %p162
      %p165 = scmp.ne.s32.totalorder %s150, %s164
      %p166 = scmp.eq.s32.totalorder %s21, 0
      %p167 = por %p165, %p166
      %s168 = ssub.s32 %s22, %s34
      %p169 = scmp.eq.s32.totalorder %s168, 0
      %s171 = sadd.s32 %s170, 1
      %s172 = scalar_select %p169, %s170, %s171
      %p175 = pneg %p169
      %p176 = scmp.eq.s32.totalorder %s15, 1
      %p177 = por %p175, %p176
      %p178 = scmp.ne.s32.totalorder %s170, %s173
      %p179 = scmp.eq.s32.totalorder %s15, 0
      %p180 = por %p178, %p179
      %p181 = scmp.ne.s32.totalorder %s170, %s173
      %p182 = scmp.eq.s32.totalorder %s20, 1
      %p183 = por %p181, %p182
      %p184 = scmp.ne.s32.totalorder %s173, %s174
      %p185 = scmp.eq.s32.totalorder %s20, 0
      %p186 = por %p184, %p185
      %p187 = scmp.ne.s32.totalorder %s173, %s174
      %p188 = scmp.eq.s32.totalorder %s21, 1
      %p189 = por %p187, %p188
      %p191 = scmp.ne.s32.totalorder %s174, %s190
      %p192 = scmp.eq.s32.totalorder %s21, 0
      %p193 = por %p191, %p192
      %p194 = scmp.le.s32.totalorder 1, %s15
      %p195 = scmp.lt.s32.totalorder %s15, 3
      %p196 = pnand %p194, %p195
      %p197 = pneg %p196
      // Predicated region
      $region9: #{pointnetfeat_forward.2} parent=5 // pred_check
        _
      $region10: #{pointnetfeat_forward.2} parent=5 // pred_check_branch
        %199 = sbr.rel (%p196) target = $region12
      $region11: #{pointnetfeat_forward.2} parent=5 // pred_region
        %s200 = ssub.s32 %s15, 1
        // Predicated region
        $region13: #{pointnetfeat_forward.2} parent=11 // pred_check
          %p201 = pneg %p76
        $region14: #{pointnetfeat_forward.2} parent=11 // pred_check_branch
          %203 = sbr.rel (%p201) target = $region16
        $region15: #{pointnetfeat_forward.2} parent=11 // pred_region
          %s205 = ssub.s32 64, 64
          %206 = vsyncadd [#allocation3], %s205
          %s208 = sshll.u32 [#allocation2], 4
          %s209 = int_to_ptr.vmem [resolvable:$true] %s208
          %211 = dma.hbm_to_vmem [thread:$0]  %s1, 64, %s209, [#allocation3]
        $region16: #{pointnetfeat_forward.2} parent=11 // pred_fallthru
          _
        // Predicated region
        $region17: #{pointnetfeat_forward.2} parent=11 // pred_check
          %p212 = pneg %p97
        $region18: #{pointnetfeat_forward.2} parent=11 // pred_check_branch
          %214 = sbr.rel (%p212) target = $region20
        $region19: #{pointnetfeat_forward.2} parent=11 // pred_region
          %s216 = ssub.s32 16, 16
          %217 = vsyncadd [#allocation5], %s216
          %s219 = sshll.u32 [#allocation4], 4
          %s220 = int_to_ptr.vmem [resolvable:$true] %s219
          %222 = dma.hbm_to_vmem [thread:$0]  %s2, 16, %s220, [#allocation5]
        $region20: #{pointnetfeat_forward.2} parent=11 // pred_fallthru
          _
        // Predicated region
        $region21: #{pointnetfeat_forward.2} parent=11 // pred_check
          %p223 = pneg %p118
        $region22: #{pointnetfeat_forward.2} parent=11 // pred_check_branch
          %225 = sbr.rel (%p223) target = $region24
        $region23: #{pointnetfeat_forward.2} parent=11 // pred_region
          %s227 = ssub.s32 512, 512
          %228 = vsyncadd [#allocation5], %s227
          %s229 = sshll.u32 [#allocation6], 4
          %s230 = int_to_ptr.vmem [resolvable:$true] %s229
          %235 = dma.hbm_to_vmem [thread:$0]  %s3, 512, %s230, [#allocation5], 64, 64, 4
        $region24: #{pointnetfeat_forward.2} parent=11 // pred_fallthru
          _
        // Predicated region
        $region25: #{pointnetfeat_forward.2} parent=11 // pred_check
          %p236 = pneg %p139
        $region26: #{pointnetfeat_forward.2} parent=11 // pred_check_branch
          %238 = sbr.rel (%p236) target = $region28
        $region27: #{pointnetfeat_forward.2} parent=11 // pred_region
          %s240 = ssub.s32 16, 16
          %241 = vsyncadd [#allocation8], %s240
          %s243 = sshll.u32 [#allocation7], 4
          %s244 = int_to_ptr.vmem [resolvable:$true] %s243
          %246 = dma.hbm_to_vmem [thread:$0]  %s4, 16, %s244, [#allocation8]
        $region28: #{pointnetfeat_forward.2} parent=11 // pred_fallthru
          _
        // Predicated region
        $region29: #{pointnetfeat_forward.2} parent=11 // pred_check
          %p247 = pneg %p160
        $region30: #{pointnetfeat_forward.2} parent=11 // pred_check_branch
          %249 = sbr.rel (%p247) target = $region32
        $region31: #{pointnetfeat_forward.2} parent=11 // pred_region
          %s251 = ssub.s32 8192, 8192
          %252 = vsyncadd [#allocation8], %s251
          %s253 = sshll.u32 [#allocation9], 4
          %s254 = int_to_ptr.vmem [resolvable:$true] %s253
          %259 = dma.hbm_to_vmem [thread:$0]  %s5, 8192, %s254, [#allocation8], 512, 512, 32
        $region32: #{pointnetfeat_forward.2} parent=11 // pred_fallthru
          _
      $region12: #{pointnetfeat_forward.2} parent=5 // pred_fallthru
        _
      %p260 = scmp.lt.s32.totalorder %s15, 2
      // Predicated region
      $region33: #{pointnetfeat_forward.2} parent=5 // pred_check
        %p261 = pneg %p260
      $region34: #{pointnetfeat_forward.2} parent=5 // pred_check_branch
        %263 = sbr.rel (%p261) target = $region36
      $region35: #{pointnetfeat_forward.2} parent=5 // pred_region
        // Predicated region
        $region37: #{pointnetfeat_forward.2} parent=35 // pred_check
          %p264 = pneg %p49
        $region38: #{pointnetfeat_forward.2} parent=35 // pred_check_branch
          %266 = sbr.rel (%p264) target = $region40
        $region39: #{pointnetfeat_forward.2} parent=35 // pred_region
          %s267 = smul.u32 2, %s23
          %p268 = scmp.lt.s32.totalorder %s22, 1
          %s269 = scalar_select %p268, %s22, 1
          %p270 = scmp.lt.s32.totalorder %s267, 1
          %s271 = scalar_select %p270, %s267, 1
          %s272 = smul.addr %s269, 2
          %s273 = sadd.s32 %s271, %s272
          %s274 = smul.addr %s273, 8
          %s275 = scalar_lea.vmem %s0, %s274
          %s276 = smul.u32 2, %s23
        $region40: #{pointnetfeat_forward.2} parent=35 // pred_fallthru
          _
      $region36: #{pointnetfeat_forward.2} parent=5 // pred_fallthru
        _
      %p277 = scmp.le.s32.totalorder 1, %s15
      %p278 = scmp.lt.s32.totalorder %s15, 3
      %p279 = pnand %p277, %p278
      %p280 = pneg %p279
      // Predicated region
      $region41: #{pointnetfeat_forward.2} parent=5 // pred_check
        _
      $region42: #{pointnetfeat_forward.2} parent=5 // pred_check_branch
        %282 = sbr.rel (%p279) target = $region44
      $region43: #{pointnetfeat_forward.2} parent=5 // pred_region
        %s283 = ssub.s32 %s15, 1
        // Predicated region
        $region45: #{pointnetfeat_forward.2} parent=43 // pred_check
          %p284 = pneg %p76
        $region46: #{pointnetfeat_forward.2} parent=43 // pred_check_branch
          %286 = sbr.rel (%p284) target = $region48
        $region47: #{pointnetfeat_forward.2} parent=43 // pred_region
          %287 = dma.done [#allocation3], 64
        $region48: #{pointnetfeat_forward.2} parent=43 // pred_fallthru
          _
        // Predicated region
        $region49: #{pointnetfeat_forward.2} parent=43 // pred_check
          %p288 = pneg %p97
        $region50: #{pointnetfeat_forward.2} parent=43 // pred_check_branch
          %290 = sbr.rel (%p288) target = $region52
        $region51: #{pointnetfeat_forward.2} parent=43 // pred_region
          %291 = dma.done [#allocation5], 16
        $region52: #{pointnetfeat_forward.2} parent=43 // pred_fallthru
          _
        // Predicated region
        $region53: #{pointnetfeat_forward.2} parent=43 // pred_check
          %p292 = pneg %p118
        $region54: #{pointnetfeat_forward.2} parent=43 // pred_check_branch
          %294 = sbr.rel (%p292) target = $region56
        $region55: #{pointnetfeat_forward.2} parent=43 // pred_region
          %295 = dma.done [#allocation5], 512
        $region56: #{pointnetfeat_forward.2} parent=43 // pred_fallthru
          _
        // Predicated region
        $region57: #{pointnetfeat_forward.2} parent=43 // pred_check
          %p296 = pneg %p139
        $region58: #{pointnetfeat_forward.2} parent=43 // pred_check_branch
          %298 = sbr.rel (%p296) target = $region60
        $region59: #{pointnetfeat_forward.2} parent=43 // pred_region
          %299 = dma.done [#allocation8], 16
        $region60: #{pointnetfeat_forward.2} parent=43 // pred_fallthru
          _
        // Predicated region
        $region61: #{pointnetfeat_forward.2} parent=43 // pred_check
          %p300 = pneg %p160
        $region62: #{pointnetfeat_forward.2} parent=43 // pred_check_branch
          %302 = sbr.rel (%p300) target = $region64
        $region63: #{pointnetfeat_forward.2} parent=43 // pred_region
          %303 = dma.done [#allocation8], 8192
        $region64: #{pointnetfeat_forward.2} parent=43 // pred_fallthru
          _
        %s304 = smul.u32 2, %s25
        %p305 = scmp.lt.s32.totalorder %s24, 1
        %s306 = scalar_select %p305, %s24, 1
        %p307 = scmp.lt.s32.totalorder %s304, 1
        %s308 = scalar_select %p307, %s304, 1
        %s309 = smul.addr %s306, 2
        %s310 = sadd.s32 %s308, %s309
        %s311 = smul.addr %s310, 8
        %s312 = scalar_lea.vmem %s0, %s311
        %p313 = pneg %p55
        %p314 = pneg %p52
        %p315 = pneg %p76
        %p316 = pneg %p73
        %p317 = pneg %p97
        %p318 = pneg %p94
        %p319 = pneg %p118
        %p320 = pneg %p115
        %p321 = pneg %p139
        %p322 = pneg %p136
        %p323 = pneg %p160
        %p324 = pneg %p157
        %p325 = pneg %p186
        %p326 = pneg %p183
        %p327 = scmp.lt.s32.totalorder %s24, 1
        %s328 = scalar_select %p327, %s24, 1
        %s329 = smul.addr %s328, 8
        %s330 = scalar_lea.vmem %s6, %s329
        %s331 = smul.u32 2, %s25
        %p332 = scmp.lt.s32.totalorder %s24, 1
        %s333 = scalar_select %p332, %s24, 1
        %p334 = scmp.lt.s32.totalorder %s331, 1
        %s335 = scalar_select %p334, %s331, 1
        %s336 = smul.addr %s333, 2
        %s337 = sadd.s32 %s335, %s336
        %s338 = smul.addr %s337, 8
        %s339 = scalar_lea.vmem %s0, %s338
        %s340 = smul.u32 2, %s25
        %p341 = scmp.lt.s32.totalorder %s24, 1
        %s342 = scalar_select %p341, %s24, 1
        %s343 = smul.addr %s342, 8
        %s344 = scalar_lea.vmem %s6, %s343
        %p346 = scmp.eq.s32.totalorder %s25, 0
        // Predicated region
        $region65: #{pointnetfeat_forward.2} parent=43 // pred_check
          %p347 = pneg %p346
        $region66: #{pointnetfeat_forward.2} parent=43 // pred_check_branch
          %349 = sbr.rel (%p347) target = $region68
        $region67: #{pointnetfeat_forward.2} parent=43 // pred_region
          %350 = vst [vmem:[%s344] sm:$0xff] -inf
        $region68: #{pointnetfeat_forward.2} parent=43 // pred_fallthru
          _
        %v351 = vld [vmem:[%s339] sm:$0xff]
        %v352 = vld [vmem:[%s339 + $0x8] sm:$0xff]
        %v353 = vld [vmem:[#allocation2] sm:$0x1]
        %355 = vset.pattern.permute.xlu0 0
        %356 = vperm.xlu0 %355, %v351
        %v357 = vpop.permute.xlu0 %356
        %360 = vset.pattern.permute.xlu0 0
        %361 = vperm.xlu0 %360, %v352
        %v362 = vpop.permute.xlu0 %361
        %v364 = vlaneseq
        %v365 = vshrl.u32 %v364, 7
        %v366 = vsub.s32 0, %v365
        %v367 = vrot.slane %v353, %v366
        %v368 = vmul.f32 %v357, %v367
        %v369 = vmul.f32 %v362, %v367
        %v370 = vld [vmem:[#allocation2 + $0x1] sm:$0x1]
        %371 = vset.pattern.permute.xlu0 1
        %372 = vperm.xlu0 %371, %v351
        %v373 = vpop.permute.xlu0 %372
        %375 = vset.pattern.permute.xlu0 1
        %376 = vperm.xlu0 %375, %v352
        %v377 = vpop.permute.xlu0 %376
        %v379 = vlaneseq
        %v380 = vshrl.u32 %v379, 7
        %v381 = vsub.s32 0, %v380
        %v382 = vrot.slane %v370, %v381
        %v383 = vmul.f32 %v373, %v382
        %v384 = vmul.f32 %v377, %v382
        %v385 = vadd.f32 %v368, %v383
        %v386 = vadd.f32 %v369, %v384
        %v387 = vld [vmem:[#allocation2 + $0x2] sm:$0x1]
        %388 = vset.pattern.permute.xlu0 2
        %389 = vperm.xlu0 %388, %v351
        %v390 = vpop.permute.xlu0 %389
        %392 = vset.pattern.permute.xlu0 2
        %393 = vperm.xlu0 %392, %v352
        %v394 = vpop.permute.xlu0 %393
        %v396 = vlaneseq
        %v397 = vshrl.u32 %v396, 7
        %v398 = vsub.s32 0, %v397
        %v399 = vrot.slane %v387, %v398
        %v400 = vmul.f32 %v390, %v399
        %v401 = vmul.f32 %v394, %v399
        %v402 = vadd.f32 %v385, %v400
        %v403 = vadd.f32 %v386, %v401
        %v404 = vld [vmem:[#allocation4] sm:$0x1]
        %v406 = vlaneseq
        %v407 = vshrl.u32 %v406, 7
        %v408 = vsub.s32 0, %v407
        %v409 = vrot.slane %v404, %v408
        %v411 = vadd.f32 %v402, %v409
        %v412 = vadd.f32 %v403, %v409
        %v413 = vmax.f32 %v411, 0.0
        %v414 = vmax.f32 %v412, 0.0
        %v415 = vpack.c.bf16 %v414, %v413
        %v416 = vld [vmem:[#allocation6] sm:$0xf]
        %v417 = vld [vmem:[#allocation6 + $0x4] sm:$0xf]
        %v418 = vld [vmem:[#allocation6 + $0x8] sm:$0xf]
        %v419 = vld [vmem:[#allocation6 + $0xc] sm:$0xf]
        %v420 = vld [vmem:[#allocation6 + $0x10] sm:$0xf]
        %v421 = vld [vmem:[#allocation6 + $0x14] sm:$0xf]
        %v422 = vld [vmem:[#allocation6 + $0x18] sm:$0xf]
        %v423 = vld [vmem:[#allocation6 + $0x1c] sm:$0xf]
        %v424 = vld [vmem:[#allocation7] sm:$0x1]
        %v426 = vlaneseq
        %v427 = vshrl.u32 %v426, 7
        %v428 = vsub.s32 0, %v427
        %v429 = vrot.slane %v424, %v428
        %v439 = vunpack.c.l.b16 %v416
        %v440 = vunpack.c.l.b16 %v417
        %v441 = vunpack.c.l.b16 %v418
        %v442 = vunpack.c.l.b16 %v419
        %v443 = vunpack.c.l.b16 %v420
        %v444 = vunpack.c.l.b16 %v421
        %v445 = vunpack.c.l.b16 %v422
        %v446 = vunpack.c.l.b16 %v423
        %v447 = vpack.c.b16 %v440, %v439
        %v448 = vpack.c.b16 %v442, %v441
        %v449 = vpack.c.b16 %v444, %v443
        %v450 = vpack.c.b16 %v446, %v445
        %vm455 = vcmask 523264
        %v457 = vsel %vm455, %v415, 0
        %459 = vmatprep.subr.bf16.mxu0 0
        %460 = vmatpush1.bf16.msra.mxu0 %v447
        %461 = vmatprep.subr.bf16.mxu0 0
        %462 = vmatpush1.bf16.msra.mxu0 %v448
        %463 = vmatprep.subr.bf16.mxu0 0
        %464 = vmatpush1.bf16.msra.mxu0 %v449
        %465 = vmatprep.subr.bf16.mxu0 0
        %466 = vmatpush1.bf16.msra.mxu0 %v450
        %467 = vmatprep.subr.bf16.mxu0 0
        %468 = vmatpush1.bf16.msra.mxu0 0
        %469 = vmatprep.subr.bf16.mxu0 0
        %470 = vmatpush1.bf16.msra.mxu0 0
        %471 = vmatprep.subr.bf16.mxu0 0
        %472 = vmatpush1.bf16.msra.mxu0 0
        %473 = vmatprep.subr.bf16.mxu0 0
        %474 = vmatpush1.bf16.msra.mxu0 0
        %475 = vmatprep.subr.bf16.mxu0 0
        %476 = vmatpush1.bf16.msra.mxu0 0
        %477 = vmatprep.subr.bf16.mxu0 0
        %478 = vmatpush1.bf16.msra.mxu0 0
        %479 = vmatprep.subr.bf16.mxu0 0
        %480 = vmatpush1.bf16.msra.mxu0 0
        %481 = vmatprep.subr.bf16.mxu0 0
        %482 = vmatpush1.bf16.msra.mxu0 0
        %483 = vmatprep.subr.bf16.mxu0 0
        %484 = vmatpush1.bf16.msra.mxu0 0
        %485 = vmatprep.subr.bf16.mxu0 0
        %486 = vmatpush1.bf16.msra.mxu0 0
        %487 = vmatprep.subr.bf16.mxu0 0
        %488 = vmatpush1.bf16.msra.mxu0 0
        %489 = vmatprep.subr.bf16.mxu0 0
        %490 = vmatpush1.bf16.msra.mxu0 0
        %491 = vmatprep.mubr.bf16.mxu0 0
        %492 = vmatmul.mubr.bf16.gmra.mrb[0].mxu0 %v457
        %v493 = vpop.f32.mrb[0].mxu0
        %v494 = vadd.f32 %v429, %v493
        %v495 = vpop.f32.mrb[0].mxu0
        %v496 = vpop.f32.mrb[0].mxu0
        %v497 = vadd.f32 %v429, %v496
        %v498 = vpop.f32.mrb[0].mxu0
        %499 = vdwg.mxu0
        %v500 = vmax.f32 %v494, 0.0
        %v501 = vmax.f32 %v497, 0.0
        %v502 = vpack.c.bf16 %v501, %v500
        %v503 = vld [vmem:[#allocation9] sm:$0xff]
        %v504 = vld [vmem:[#allocation9 + $0x8] sm:$0xff]
        %v505 = vld [vmem:[#allocation9 + $0x10] sm:$0xff]
        %v506 = vld [vmem:[#allocation9 + $0x18] sm:$0xff]
        %v507 = vld [vmem:[#allocation9 + $0x20] sm:$0xff]
        %v508 = vld [vmem:[#allocation9 + $0x28] sm:$0xff]
        %v509 = vld [vmem:[#allocation9 + $0x30] sm:$0xff]
        %v510 = vld [vmem:[#allocation9 + $0x38] sm:$0xff]
        %v511 = vld [vmem:[#allocation9 + $0x40] sm:$0xff]
        %v512 = vld [vmem:[#allocation9 + $0x48] sm:$0xff]
        %v513 = vld [vmem:[#allocation9 + $0x50] sm:$0xff]
        %v514 = vld [vmem:[#allocation9 + $0x58] sm:$0xff]
        %v515 = vld [vmem:[#allocation9 + $0x60] sm:$0xff]
        %v516 = vld [vmem:[#allocation9 + $0x68] sm:$0xff]
        %v517 = vld [vmem:[#allocation9 + $0x70] sm:$0xff]
        %v518 = vld [vmem:[#allocation9 + $0x78] sm:$0xff]
        %v519 = vld [vmem:[#allocation9 + $0x80] sm:$0xff]
        %v520 = vld [vmem:[#allocation9 + $0x88] sm:$0xff]
        %v521 = vld [vmem:[#allocation9 + $0x90] sm:$0xff]
        %v522 = vld [vmem:[#allocation9 + $0x98] sm:$0xff]
        %v523 = vld [vmem:[#allocation9 + $0xa0] sm:$0xff]
        %v524 = vld [vmem:[#allocation9 + $0xa8] sm:$0xff]
        %v525 = vld [vmem:[#allocation9 + $0xb0] sm:$0xff]
        %v526 = vld [vmem:[#allocation9 + $0xb8] sm:$0xff]
        %v527 = vld [vmem:[#allocation9 + $0xc0] sm:$0xff]
        %v528 = vld [vmem:[#allocation9 + $0xc8] sm:$0xff]
        %v529 = vld [vmem:[#allocation9 + $0xd0] sm:$0xff]
        %v530 = vld [vmem:[#allocation9 + $0xd8] sm:$0xff]
        %v531 = vld [vmem:[#allocation9 + $0xe0] sm:$0xff]
        %v532 = vld [vmem:[#allocation9 + $0xe8] sm:$0xff]
        %v533 = vld [vmem:[#allocation9 + $0xf0] sm:$0xff]
        %v534 = vld [vmem:[#allocation9 + $0xf8] sm:$0xff]
        %v535 = vld [vmem:[#allocation9 + $0x100] sm:$0xff]
        %v536 = vld [vmem:[#allocation9 + $0x108] sm:$0xff]
        %v537 = vld [vmem:[#allocation9 + $0x110] sm:$0xff]
        %v538 = vld [vmem:[#allocation9 + $0x118] sm:$0xff]
        %v539 = vld [vmem:[#allocation9 + $0x120] sm:$0xff]
        %v540 = vld [vmem:[#allocation9 + $0x128] sm:$0xff]
        %v541 = vld [vmem:[#allocation9 + $0x130] sm:$0xff]
        %v542 = vld [vmem:[#allocation9 + $0x138] sm:$0xff]
        %v543 = vld [vmem:[#allocation9 + $0x140] sm:$0xff]
        %v544 = vld [vmem:[#allocation9 + $0x148] sm:$0xff]
        %v545 = vld [vmem:[#allocation9 + $0x150] sm:$0xff]
        %v546 = vld [vmem:[#allocation9 + $0x158] sm:$0xff]
        %v547 = vld [vmem:[#allocation9 + $0x160] sm:$0xff]
        %v548 = vld [vmem:[#allocation9 + $0x168] sm:$0xff]
        %v549 = vld [vmem:[#allocation9 + $0x170] sm:$0xff]
        %v550 = vld [vmem:[#allocation9 + $0x178] sm:$0xff]
        %v551 = vld [vmem:[#allocation9 + $0x180] sm:$0xff]
        %v552 = vld [vmem:[#allocation9 + $0x188] sm:$0xff]
        %v553 = vld [vmem:[#allocation9 + $0x190] sm:$0xff]
        %v554 = vld [vmem:[#allocation9 + $0x198] sm:$0xff]
        %v555 = vld [vmem:[#allocation9 + $0x1a0] sm:$0xff]
        %v556 = vld [vmem:[#allocation9 + $0x1a8] sm:$0xff]
        %v557 = vld [vmem:[#allocation9 + $0x1b0] sm:$0xff]
        %v558 = vld [vmem:[#allocation9 + $0x1b8] sm:$0xff]
        %v559 = vld [vmem:[#allocation9 + $0x1c0] sm:$0xff]
        %v560 = vld [vmem:[#allocation9 + $0x1c8] sm:$0xff]
        %v561 = vld [vmem:[#allocation9 + $0x1d0] sm:$0xff]
        %v562 = vld [vmem:[#allocation9 + $0x1d8] sm:$0xff]
        %v563 = vld [vmem:[#allocation9 + $0x1e0] sm:$0xff]
        %v564 = vld [vmem:[#allocation9 + $0x1e8] sm:$0xff]
        %v565 = vld [vmem:[#allocation9 + $0x1f0] sm:$0xff]
        %v566 = vld [vmem:[#allocation9 + $0x1f8] sm:$0xff]
        %v631 = vunpack.c.l.b16 %v503
        %v632 = vunpack.c.h.b16 %v503
        %v633 = vunpack.c.l.b16 %v504
        %v634 = vunpack.c.h.b16 %v504
        %v635 = vunpack.c.l.b16 %v505
        %v636 = vunpack.c.h.b16 %v505
        %v637 = vunpack.c.l.b16 %v506
        %v638 = vunpack.c.h.b16 %v506
        %v639 = vunpack.c.l.b16 %v507
        %v640 = vunpack.c.h.b16 %v507
        %v641 = vunpack.c.l.b16 %v508
        %v642 = vunpack.c.h.b16 %v508
        %v643 = vunpack.c.l.b16 %v509
        %v644 = vunpack.c.h.b16 %v509
        %v645 = vunpack.c.l.b16 %v510
        %v646 = vunpack.c.h.b16 %v510
        %v647 = vunpack.c.l.b16 %v511
        %v648 = vunpack.c.h.b16 %v511
        %v649 = vunpack.c.l.b16 %v512
        %v650 = vunpack.c.h.b16 %v512
        %v651 = vunpack.c.l.b16 %v513
        %v652 = vunpack.c.h.b16 %v513
        %v653 = vunpack.c.l.b16 %v514
        %v654 = vunpack.c.h.b16 %v514
        %v655 = vunpack.c.l.b16 %v515
        %v656 = vunpack.c.h.b16 %v515
        %v657 = vunpack.c.l.b16 %v516
        %v658 = vunpack.c.h.b16 %v516
        %v659 = vunpack.c.l.b16 %v517
        %v660 = vunpack.c.h.b16 %v517
        %v661 = vunpack.c.l.b16 %v518
        %v662 = vunpack.c.h.b16 %v518
        %v663 = vunpack.c.l.b16 %v519
        %v664 = vunpack.c.h.b16 %v519
        %v665 = vunpack.c.l.b16 %v520
        %v666 = vunpack.c.h.b16 %v520
        %v667 = vunpack.c.l.b16 %v521
        %v668 = vunpack.c.h.b16 %v521
        %v669 = vunpack.c.l.b16 %v522
        %v670 = vunpack.c.h.b16 %v522
        %v671 = vunpack.c.l.b16 %v523
        %v672 = vunpack.c.h.b16 %v523
        %v673 = vunpack.c.l.b16 %v524
        %v674 = vunpack.c.h.b16 %v524
        %v675 = vunpack.c.l.b16 %v525
        %v676 = vunpack.c.h.b16 %v525
        %v677 = vunpack.c.l.b16 %v526
        %v678 = vunpack.c.h.b16 %v526
        %v679 = vunpack.c.l.b16 %v527
        %v680 = vunpack.c.h.b16 %v527
        %v681 = vunpack.c.l.b16 %v528
        %v682 = vunpack.c.h.b16 %v528
        %v683 = vunpack.c.l.b16 %v529
        %v684 = vunpack.c.h.b16 %v529
        %v685 = vunpack.c.l.b16 %v530
        %v686 = vunpack.c.h.b16 %v530
        %v687 = vunpack.c.l.b16 %v531
        %v688 = vunpack.c.h.b16 %v531
        %v689 = vunpack.c.l.b16 %v532
        %v690 = vunpack.c.h.b16 %v532
        %v691 = vunpack.c.l.b16 %v533
        %v692 = vunpack.c.h.b16 %v533
        %v693 = vunpack.c.l.b16 %v534
        %v694 = vunpack.c.h.b16 %v534
        %v695 = vunpack.c.l.b16 %v535
        %v696 = vunpack.c.h.b16 %v535
        %v697 = vunpack.c.l.b16 %v536
        %v698 = vunpack.c.h.b16 %v536
        %v699 = vunpack.c.l.b16 %v537
        %v700 = vunpack.c.h.b16 %v537
        %v701 = vunpack.c.l.b16 %v538
        %v702 = vunpack.c.h.b16 %v538
        %v703 = vunpack.c.l.b16 %v539
        %v704 = vunpack.c.h.b16 %v539
        %v705 = vunpack.c.l.b16 %v540
        %v706 = vunpack.c.h.b16 %v540
        %v707 = vunpack.c.l.b16 %v541
        %v708 = vunpack.c.h.b16 %v541
        %v709 = vunpack.c.l.b16 %v542
        %v710 = vunpack.c.h.b16 %v542
        %v711 = vunpack.c.l.b16 %v543
        %v712 = vunpack.c.h.b16 %v543
        %v713 = vunpack.c.l.b16 %v544
        %v714 = vunpack.c.h.b16 %v544
        %v715 = vunpack.c.l.b16 %v545
        %v716 = vunpack.c.h.b16 %v545
        %v717 = vunpack.c.l.b16 %v546
        %v718 = vunpack.c.h.b16 %v546
        %v719 = vunpack.c.l.b16 %v547
        %v720 = vunpack.c.h.b16 %v547
        %v721 = vunpack.c.l.b16 %v548
        %v722 = vunpack.c.h.b16 %v548
        %v723 = vunpack.c.l.b16 %v549
        %v724 = vunpack.c.h.b16 %v549
        %v725 = vunpack.c.l.b16 %v550
        %v726 = vunpack.c.h.b16 %v550
        %v727 = vunpack.c.l.b16 %v551
        %v728 = vunpack.c.h.b16 %v551
        %v729 = vunpack.c.l.b16 %v552
        %v730 = vunpack.c.h.b16 %v552
        %v731 = vunpack.c.l.b16 %v553
        %v732 = vunpack.c.h.b16 %v553
        %v733 = vunpack.c.l.b16 %v554
        %v734 = vunpack.c.h.b16 %v554
        %v735 = vunpack.c.l.b16 %v555
        %v736 = vunpack.c.h.b16 %v555
        %v737 = vunpack.c.l.b16 %v556
        %v738 = vunpack.c.h.b16 %v556
        %v739 = vunpack.c.l.b16 %v557
        %v740 = vunpack.c.h.b16 %v557
        %v741 = vunpack.c.l.b16 %v558
        %v742 = vunpack.c.h.b16 %v558
        %v743 = vunpack.c.l.b16 %v559
        %v744 = vunpack.c.h.b16 %v559
        %v745 = vunpack.c.l.b16 %v560
        %v746 = vunpack.c.h.b16 %v560
        %v747 = vunpack.c.l.b16 %v561
        %v748 = vunpack.c.h.b16 %v561
        %v749 = vunpack.c.l.b16 %v562
        %v750 = vunpack.c.h.b16 %v562
        %v751 = vunpack.c.l.b16 %v563
        %v752 = vunpack.c.h.b16 %v563
        %v753 = vunpack.c.l.b16 %v564
        %v754 = vunpack.c.h.b16 %v564
        %v755 = vunpack.c.l.b16 %v565
        %v756 = vunpack.c.h.b16 %v565
        %v757 = vunpack.c.l.b16 %v566
        %v758 = vunpack.c.h.b16 %v566
        %v759 = vpack.c.b16 %v639, %v631
        %v760 = vpack.c.b16 %v640, %v632
        %v761 = vpack.c.b16 %v641, %v633
        %v762 = vpack.c.b16 %v642, %v634
        %v763 = vpack.c.b16 %v643, %v635
        %v764 = vpack.c.b16 %v644, %v636
        %v765 = vpack.c.b16 %v645, %v637
        %v766 = vpack.c.b16 %v646, %v638
        %v767 = vpack.c.b16 %v655, %v647
        %v768 = vpack.c.b16 %v656, %v648
        %v769 = vpack.c.b16 %v657, %v649
        %v770 = vpack.c.b16 %v658, %v650
        %v771 = vpack.c.b16 %v659, %v651
        %v772 = vpack.c.b16 %v660, %v652
        %v773 = vpack.c.b16 %v661, %v653
        %v774 = vpack.c.b16 %v662, %v654
        %v775 = vpack.c.b16 %v671, %v663
        %v776 = vpack.c.b16 %v672, %v664
        %v777 = vpack.c.b16 %v673, %v665
        %v778 = vpack.c.b16 %v674, %v666
        %v779 = vpack.c.b16 %v675, %v667
        %v780 = vpack.c.b16 %v676, %v668
        %v781 = vpack.c.b16 %v677, %v669
        %v782 = vpack.c.b16 %v678, %v670
        %v783 = vpack.c.b16 %v687, %v679
        %v784 = vpack.c.b16 %v688, %v680
        %v785 = vpack.c.b16 %v689, %v681
        %v786 = vpack.c.b16 %v690, %v682
        %v787 = vpack.c.b16 %v691, %v683
        %v788 = vpack.c.b16 %v692, %v684
        %v789 = vpack.c.b16 %v693, %v685
        %v790 = vpack.c.b16 %v694, %v686
        %v791 = vpack.c.b16 %v703, %v695
        %v792 = vpack.c.b16 %v704, %v696
        %v793 = vpack.c.b16 %v705, %v697
        %v794 = vpack.c.b16 %v706, %v698
        %v795 = vpack.c.b16 %v707, %v699
        %v796 = vpack.c.b16 %v708, %v700
        %v797 = vpack.c.b16 %v709, %v701
        %v798 = vpack.c.b16 %v710, %v702
        %v799 = vpack.c.b16 %v719, %v711
        %v800 = vpack.c.b16 %v720, %v712
        %v801 = vpack.c.b16 %v721, %v713
        %v802 = vpack.c.b16 %v722, %v714
        %v803 = vpack.c.b16 %v723, %v715
        %v804 = vpack.c.b16 %v724, %v716
        %v805 = vpack.c.b16 %v725, %v717
        %v806 = vpack.c.b16 %v726, %v718
        %v807 = vpack.c.b16 %v735, %v727
        %v808 = vpack.c.b16 %v736, %v728
        %v809 = vpack.c.b16 %v737, %v729
        %v810 = vpack.c.b16 %v738, %v730
        %v811 = vpack.c.b16 %v739, %v731
        %v812 = vpack.c.b16 %v740, %v732
        %v813 = vpack.c.b16 %v741, %v733
        %v814 = vpack.c.b16 %v742, %v734
        %v815 = vpack.c.b16 %v751, %v743
        %v816 = vpack.c.b16 %v752, %v744
        %v817 = vpack.c.b16 %v753, %v745
        %v818 = vpack.c.b16 %v754, %v746
        %v819 = vpack.c.b16 %v755, %v747
        %v820 = vpack.c.b16 %v756, %v748
        %v821 = vpack.c.b16 %v757, %v749
        %v822 = vpack.c.b16 %v758, %v750
        %887 = vmatprep.subr.bf16.mxu0 %v760
        %888 = vmatpush1.bf16.msra.mxu0 %v759
        %889 = vmatprep.subr.bf16.mxu0 %v768
        %890 = vmatpush1.bf16.msra.mxu0 %v767
        %891 = vmatprep.subr.bf16.mxu0 %v776
        %892 = vmatpush1.bf16.msra.mxu0 %v775
        %893 = vmatprep.subr.bf16.mxu0 %v784
        %894 = vmatpush1.bf16.msra.mxu0 %v783
        %895 = vmatprep.subr.bf16.mxu0 %v792
        %896 = vmatpush1.bf16.msra.mxu0 %v791
        %897 = vmatprep.subr.bf16.mxu0 %v800
        %898 = vmatpush1.bf16.msra.mxu0 %v799
        %899 = vmatprep.subr.bf16.mxu0 %v808
        %900 = vmatpush1.bf16.msra.mxu0 %v807
        %901 = vmatprep.subr.bf16.mxu0 %v816
        %902 = vmatpush1.bf16.msra.mxu0 %v815
        %903 = vmatprep.subr.bf16.mxu0 0
        %904 = vmatpush1.bf16.msra.mxu0 0
        %905 = vmatprep.subr.bf16.mxu0 0
        %906 = vmatpush1.bf16.msra.mxu0 0
        %907 = vmatprep.subr.bf16.mxu0 0
        %908 = vmatpush1.bf16.msra.mxu0 0
        %909 = vmatprep.subr.bf16.mxu0 0
        %910 = vmatpush1.bf16.msra.mxu0 0
        %911 = vmatprep.subr.bf16.mxu0 0
        %912 = vmatpush1.bf16.msra.mxu0 0
        %913 = vmatprep.subr.bf16.mxu0 0
        %914 = vmatpush1.bf16.msra.mxu0 0
        %915 = vmatprep.subr.bf16.mxu0 0
        %916 = vmatpush1.bf16.msra.mxu0 0
        %917 = vmatprep.subr.bf16.mxu0 0
        %918 = vmatpush1.bf16.msra.mxu0 0
        %919 = vmatprep.mubr.bf16.mxu0 0
        %920 = vmatmul.mubr.bf16.gmra.mrb[0].mxu0 %v502
        %v921 = vpop.f32.mrb[0].mxu0
        %v922 = vadd.f32 0.0, %v921
        %v923 = vpop.f32.mrb[0].mxu0
        %v924 = vadd.f32 0.0, %v923
        %v925 = vpop.f32.mrb[0].mxu0
        %v926 = vadd.f32 0.0, %v925
        %v927 = vpop.f32.mrb[0].mxu0
        %v928 = vadd.f32 0.0, %v927
        %929 = vdwg.mxu0
        %930 = vmatprep.subr.bf16.mxu0 %v762
        %931 = vmatpush1.bf16.msra.mxu0 %v761
        %932 = vmatprep.subr.bf16.mxu0 %v770
        %933 = vmatpush1.bf16.msra.mxu0 %v769
        %934 = vmatprep.subr.bf16.mxu0 %v778
        %935 = vmatpush1.bf16.msra.mxu0 %v777
        %936 = vmatprep.subr.bf16.mxu0 %v786
        %937 = vmatpush1.bf16.msra.mxu0 %v785
        %938 = vmatprep.subr.bf16.mxu0 %v794
        %939 = vmatpush1.bf16.msra.mxu0 %v793
        %940 = vmatprep.subr.bf16.mxu0 %v802
        %941 = vmatpush1.bf16.msra.mxu0 %v801
        %942 = vmatprep.subr.bf16.mxu0 %v810
        %943 = vmatpush1.bf16.msra.mxu0 %v809
        %944 = vmatprep.subr.bf16.mxu0 %v818
        %945 = vmatpush1.bf16.msra.mxu0 %v817
        %946 = vmatprep.subr.bf16.mxu0 0
        %947 = vmatpush1.bf16.msra.mxu0 0
        %948 = vmatprep.subr.bf16.mxu0 0
        %949 = vmatpush1.bf16.msra.mxu0 0
        %950 = vmatprep.subr.bf16.mxu0 0
        %951 = vmatpush1.bf16.msra.mxu0 0
        %952 = vmatprep.subr.bf16.mxu0 0
        %953 = vmatpush1.bf16.msra.mxu0 0
        %954 = vmatprep.subr.bf16.mxu0 0
        %955 = vmatpush1.bf16.msra.mxu0 0
        %956 = vmatprep.subr.bf16.mxu0 0
        %957 = vmatpush1.bf16.msra.mxu0 0
        %958 = vmatprep.subr.bf16.mxu0 0
        %959 = vmatpush1.bf16.msra.mxu0 0
        %960 = vmatprep.subr.bf16.mxu0 0
        %961 = vmatpush1.bf16.msra.mxu0 0
        %962 = vmatprep.mubr.bf16.mxu0 0
        %963 = vmatmul.mubr.bf16.gmra.mrb[0].mxu0 %v502
        %v964 = vpop.f32.mrb[0].mxu0
        %v965 = vadd.f32 0.0, %v964
        %v966 = vpop.f32.mrb[0].mxu0
        %v967 = vadd.f32 0.0, %v966
        %v968 = vpop.f32.mrb[0].mxu0
        %v969 = vadd.f32 0.0, %v968
        %v970 = vpop.f32.mrb[0].mxu0
        %v971 = vadd.f32 0.0, %v970
        %972 = vdwg.mxu0
        %973 = vmatprep.subr.bf16.mxu0 %v764
        %974 = vmatpush1.bf16.msra.mxu0 %v763
        %975 = vmatprep.subr.bf16.mxu0 %v772
        %976 = vmatpush1.bf16.msra.mxu0 %v771
        %977 = vmatprep.subr.bf16.mxu0 %v780
        %978 = vmatpush1.bf16.msra.mxu0 %v779
        %979 = vmatprep.subr.bf16.mxu0 %v788
        %980 = vmatpush1.bf16.msra.mxu0 %v787
        %981 = vmatprep.subr.bf16.mxu0 %v796
        %982 = vmatpush1.bf16.msra.mxu0 %v795
        %983 = vmatprep.subr.bf16.mxu0 %v804
        %984 = vmatpush1.bf16.msra.mxu0 %v803
        %985 = vmatprep.subr.bf16.mxu0 %v812
        %986 = vmatpush1.bf16.msra.mxu0 %v811
        %987 = vmatprep.subr.bf16.mxu0 %v820
        %988 = vmatpush1.bf16.msra.mxu0 %v819
        %989 = vmatprep.subr.bf16.mxu0 0
        %990 = vmatpush1.bf16.msra.mxu0 0
        %991 = vmatprep.subr.bf16.mxu0 0
        %992 = vmatpush1.bf16.msra.mxu0 0
        %993 = vmatprep.subr.bf16.mxu0 0
        %994 = vmatpush1.bf16.msra.mxu0 0
        %995 = vmatprep.subr.bf16.mxu0 0
        %996 = vmatpush1.bf16.msra.mxu0 0
        %997 = vmatprep.subr.bf16.mxu0 0
        %998 = vmatpush1.bf16.msra.mxu0 0
        %999 = vmatprep.subr.bf16.mxu0 0
        %1000 = vmatpush1.bf16.msra.mxu0 0
        %1001 = vmatprep.subr.bf16.mxu0 0
        %1002 = vmatpush1.bf16.msra.mxu0 0
        %1003 = vmatprep.subr.bf16.mxu0 0
        %1004 = vmatpush1.bf16.msra.mxu0 0
        %1005 = vmatprep.mubr.bf16.mxu0 0
        %1006 = vmatmul.mubr.bf16.gmra.mrb[0].mxu0 %v502
        %v1007 = vpop.f32.mrb[0].mxu0
        %v1008 = vadd.f32 0.0, %v1007
        %v1009 = vpop.f32.mrb[0].mxu0
        %v1010 = vadd.f32 0.0, %v1009
        %v1011 = vpop.f32.mrb[0].mxu0
        %v1012 = vadd.f32 0.0, %v1011
        %v1013 = vpop.f32.mrb[0].mxu0
        %v1014 = vadd.f32 0.0, %v1013
        %1015 = vdwg.mxu0
        %1016 = vmatprep.subr.bf16.mxu0 %v766
        %1017 = vmatpush1.bf16.msra.mxu0 %v765
        %1018 = vmatprep.subr.bf16.mxu0 %v774
        %1019 = vmatpush1.bf16.msra.mxu0 %v773
        %1020 = vmatprep.subr.bf16.mxu0 %v782
        %1021 = vmatpush1.bf16.msra.mxu0 %v781
        %1022 = vmatprep.subr.bf16.mxu0 %v790
        %1023 = vmatpush1.bf16.msra.mxu0 %v789
        %1024 = vmatprep.subr.bf16.mxu0 %v798
        %1025 = vmatpush1.bf16.msra.mxu0 %v797
        %1026 = vmatprep.subr.bf16.mxu0 %v806
        %1027 = vmatpush1.bf16.msra.mxu0 %v805
        %1028 = vmatprep.subr.bf16.mxu0 %v814
        %1029 = vmatpush1.bf16.msra.mxu0 %v813
        %1030 = vmatprep.subr.bf16.mxu0 %v822
        %1031 = vmatpush1.bf16.msra.mxu0 %v821
        %1032 = vmatprep.subr.bf16.mxu0 0
        %1033 = vmatpush1.bf16.msra.mxu0 0
        %1034 = vmatprep.subr.bf16.mxu0 0
        %1035 = vmatpush1.bf16.msra.mxu0 0
        %1036 = vmatprep.subr.bf16.mxu0 0
        %1037 = vmatpush1.bf16.msra.mxu0 0
        %1038 = vmatprep.subr.bf16.mxu0 0
        %1039 = vmatpush1.bf16.msra.mxu0 0
        %1040 = vmatprep.subr.bf16.mxu0 0
        %1041 = vmatpush1.bf16.msra.mxu0 0
        %1042 = vmatprep.subr.bf16.mxu0 0
        %1043 = vmatpush1.bf16.msra.mxu0 0
        %1044 = vmatprep.subr.bf16.mxu0 0
        %1045 = vmatpush1.bf16.msra.mxu0 0
        %1046 = vmatprep.subr.bf16.mxu0 0
        %1047 = vmatpush1.bf16.msra.mxu0 0
        %1048 = vmatprep.mubr.bf16.mxu0 0
        %1049 = vmatmul.mubr.bf16.gmra.mrb[0].mxu0 %v502
        %v1050 = vpop.f32.mrb[0].mxu0
        %v1051 = vadd.f32 0.0, %v1050
        %v1052 = vpop.f32.mrb[0].mxu0
        %v1053 = vadd.f32 0.0, %v1052
        %v1054 = vpop.f32.mrb[0].mxu0
        %v1055 = vadd.f32 0.0, %v1054
        %v1056 = vpop.f32.mrb[0].mxu0
        %v1057 = vadd.f32 0.0, %v1056
        %1058 = vdwg.mxu0
        %v1059 = vld [vmem:[%s344] sm:$0xff]
        %v1060 = vmax.f32 %v922, %v926
        %v1061 = vrot.slane %v1060, 4
        %v1062 = vmax.f32 %v1060, %v1061
        %v1063 = vrot.slane %v1062, 2
        %v1064 = vmax.f32 %v1062, %v1063
        %v1065 = vrot.slane %v1064, 1
        %v1066 = vmax.f32 %v1064, %v1065
        %v1067 = vmax.f32 %v924, %v928
        %v1068 = vrot.slane %v1067, 4
        %v1069 = vmax.f32 %v1067, %v1068
        %v1070 = vrot.slane %v1069, 2
        %v1071 = vmax.f32 %v1069, %v1070
        %v1072 = vrot.slane %v1071, 1
        %v1073 = vmax.f32 %v1071, %v1072
        %v1074 = vmax.f32 %v965, %v969
        %v1075 = vrot.slane %v1074, 4
        %v1076 = vmax.f32 %v1074, %v1075
        %v1077 = vrot.slane %v1076, 2
        %v1078 = vmax.f32 %v1076, %v1077
        %v1079 = vrot.slane %v1078, 1
        %v1080 = vmax.f32 %v1078, %v1079
        %v1081 = vmax.f32 %v967, %v971
        %v1082 = vrot.slane %v1081, 4
        %v1083 = vmax.f32 %v1081, %v1082
        %v1084 = vrot.slane %v1083, 2
        %v1085 = vmax.f32 %v1083, %v1084
        %v1086 = vrot.slane %v1085, 1
        %v1087 = vmax.f32 %v1085, %v1086
        %v1088 = vmax.f32 %v1008, %v1012
        %v1089 = vrot.slane %v1088, 4
        %v1090 = vmax.f32 %v1088, %v1089
        %v1091 = vrot.slane %v1090, 2
        %v1092 = vmax.f32 %v1090, %v1091
        %v1093 = vrot.slane %v1092, 1
        %v1094 = vmax.f32 %v1092, %v1093
        %v1095 = vmax.f32 %v1010, %v1014
        %v1096 = vrot.slane %v1095, 4
        %v1097 = vmax.f32 %v1095, %v1096
        %v1098 = vrot.slane %v1097, 2
        %v1099 = vmax.f32 %v1097, %v1098
        %v1100 = vrot.slane %v1099, 1
        %v1101 = vmax.f32 %v1099, %v1100
        %v1102 = vmax.f32 %v1051, %v1055
        %v1103 = vrot.slane %v1102, 4
        %v1104 = vmax.f32 %v1102, %v1103
        %v1105 = vrot.slane %v1104, 2
        %v1106 = vmax.f32 %v1104, %v1105
        %v1107 = vrot.slane %v1106, 1
        %v1108 = vmax.f32 %v1106, %v1107
        %v1109 = vmax.f32 %v1053, %v1057
        %v1110 = vrot.slane %v1109, 4
        %v1111 = vmax.f32 %v1109, %v1110
        %v1112 = vrot.slane %v1111, 2
        %v1113 = vmax.f32 %v1111, %v1112
        %v1114 = vrot.slane %v1113, 1
        %v1115 = vmax.f32 %v1113, %v1114
        %v1124 = vcombine.low %v1066, %v1073
        %v1125 = vcombine.low %v1080, %v1087
        %v1126 = vcombine.low %v1094, %v1101
        %v1127 = vcombine.low %v1108, %v1115
        %v1129 = vunpack.c.l.s4 1966171168
        %v1130 = vunpack.c.0.s8 %v1129
        %v1131 = vlaneseq
        %v1132 = vshrl.u32 %v1131, 7
        %v1133 = vsub.s32 %v1130, %v1132
        %v1134 = vrot.slane %v1124, %v1133
        %v1136 = vunpack.c.l.s4 1966171168
        %v1137 = vunpack.c.0.s8 %v1136
        %v1138 = vlaneseq
        %v1139 = vshrl.u32 %v1138, 7
        %v1140 = vsub.s32 %v1137, %v1139
        %v1141 = vrot.slane %v1125, %v1140
        %v1143 = vunpack.c.l.s4 1966171168
        %v1144 = vunpack.c.0.s8 %v1143
        %v1145 = vlaneseq
        %v1146 = vshrl.u32 %v1145, 7
        %v1147 = vsub.s32 %v1144, %v1146
        %v1148 = vrot.slane %v1126, %v1147
        %v1150 = vunpack.c.l.s4 1966171168
        %v1151 = vunpack.c.0.s8 %v1150
        %v1152 = vlaneseq
        %v1153 = vshrl.u32 %v1152, 7
        %v1154 = vsub.s32 %v1151, %v1153
        %v1155 = vrot.slane %v1127, %v1154
        %v1156 = vcombine.low %v1134, %v1141
        %v1157 = vcombine.low %v1148, %v1155
        %v1159 = vunpack.c.l.s4 1966171168
        %v1160 = vunpack.c.0.s8 %v1159
        %v1161 = vlaneseq
        %v1162 = vshrl.u32 %v1161, 7
        %v1163 = vsub.s32 %v1160, %v1162
        %v1164 = vrot.slane %v1156, %v1163
        %v1166 = vunpack.c.l.s4 1966171168
        %v1167 = vunpack.c.0.s8 %v1166
        %v1168 = vlaneseq
        %v1169 = vshrl.u32 %v1168, 7
        %v1170 = vsub.s32 %v1167, %v1169
        %v1171 = vrot.slane %v1157, %v1170
        %v1172 = vcombine.low %v1164, %v1171
        %v1174 = vmax.f32 %v1059, %v1172
        %1175 = vst [vmem:[%s344] sm:$0xff] %v1174
        %p1176 = scmp.lt.s32.totalorder %s24, 1
        %s1177 = scalar_select %p1176, %s24, 1
        %s1178 = smul.addr %s1177, 8
        %s1179 = scalar_lea.vmem %s6, %s1178
        // Predicated region
        $region69: #{pointnetfeat_forward.2} parent=43 // pred_check
          %p1180 = pneg %p183
        $region70: #{pointnetfeat_forward.2} parent=43 // pred_check_branch
          %1182 = sbr.rel (%p1180) target = $region72
        $region71: #{pointnetfeat_forward.2} parent=43 // pred_region
          _
        $region72: #{pointnetfeat_forward.2} parent=43 // pred_fallthru
          _
      $region44: #{pointnetfeat_forward.2} parent=5 // pred_fallthru
        _
      %p1183 = scmp.le.s32.totalorder 2, %s15
      // Predicated region
      $region73: #{pointnetfeat_forward.2} parent=5 // pred_check
        %p1184 = pneg %p1183
      $region74: #{pointnetfeat_forward.2} parent=5 // pred_check_branch
        %1186 = sbr.rel (%p1184) target = $region76
      $region75: #{pointnetfeat_forward.2} parent=5 // pred_region
        %s1187 = ssub.s32 %s15, 2
        // Predicated region
        $region77: #{pointnetfeat_forward.2} parent=75 // pred_check
          %p1188 = pneg %p189
        $region78: #{pointnetfeat_forward.2} parent=75 // pred_check_branch
          %1190 = sbr.rel (%p1188) target = $region80
        $region79: #{pointnetfeat_forward.2} parent=75 // pred_region
          %p1191 = scmp.lt.s32.totalorder %s26, 1
          %s1192 = scalar_select %p1191, %s26, 1
          %s1193 = smul.addr %s1192, 8
          %s1194 = scalar_lea.vmem %s6, %s1193
        $region80: #{pointnetfeat_forward.2} parent=75 // pred_fallthru
          _
      $region76: #{pointnetfeat_forward.2} parent=5 // pred_fallthru
        _
    $region6: #{pointnetfeat_forward.2} parent=1 // loop_footer
      %s19 = sadd.s32 1, %s15
    $region7: #{pointnetfeat_forward.2} parent=1 // loop_footer_branch
      %14 = sbr.rel target = $region3
    $region8: #{pointnetfeat_forward.2} parent=1 // loop_exit
      _
    %1195 = vsyncpa [#allocation3], 1
    %s1196 = scalar_lea.sflag [#allocation3], 1
    %1197 = vsyncpa %s1196, 1
    %1198 = vsyncpa [#allocation5], 1
    %1199 = vsyncpa [#allocation8], 1

// kernel: pointnetfeat_forward.3
$region0: #{pointnetfeat_forward.3}
  #allocation0 [shape = 'u32[]', space=smem, size = 0x4, offset = 0x4, fixed_abs, tag = 'smem constant byte address 0x4 - core index']
  #allocation1 [shape = 'u32[144,128]{1,0:T(1,128)}', space=vmem, size = 0x12000, scoped, tag = 'internal scratch']
  %s0 = inlined_call_operand.vmem [shape: f32[1,16,3], index: 0, kind: input, shape index: {}]
  %s1 = inlined_call_operand.vmem [shape: f32[3,64], index: 1, kind: input, shape index: {}]
  %s2 = inlined_call_operand.vmem [shape: f32[1,64], index: 2, kind: input, shape index: {}]
  %s3 = inlined_call_operand.vmem [shape: bf16[64,128], index: 3, kind: input, shape index: {}]
  %s4 = inlined_call_operand.vmem [shape: f32[1,128], index: 4, kind: input, shape index: {}]
  %s5 = inlined_call_operand.vmem [shape: f32[1,1,128], index: 5, kind: output, shape index: {}]
  %s6 = sld [smem:[#allocation0]]
  $region34: #{pointnetfeat_forward.3} parent=0
    _
  %s8 = ssub.s32 1, %s6
  %s9 = scalar_select 0, %s8, %s6
  // Predicated region
  $region2: #{pointnetfeat_forward.3} parent=0 // pred_check
    _
  $region3: #{pointnetfeat_forward.3} parent=0 // pred_check_branch
    %11 = sbr.rel (0) target = $region5
  $region4: #{pointnetfeat_forward.3} parent=0 // pred_region
    _
  $region5: #{pointnetfeat_forward.3} parent=0 // pred_fallthru
    _
  // Predicated region
  $region6: #{pointnetfeat_forward.3} parent=0 // pred_check
    _
  $region7: #{pointnetfeat_forward.3} parent=0 // pred_check_branch
    %13 = sbr.rel (0) target = $region9
  $region8: #{pointnetfeat_forward.3} parent=0 // pred_region
    _
  $region9: #{pointnetfeat_forward.3} parent=0 // pred_fallthru
    _
  // Predicated region
  $region10: #{pointnetfeat_forward.3} parent=0 // pred_check
    _
  $region11: #{pointnetfeat_forward.3} parent=0 // pred_check_branch
    %15 = sbr.rel (0) target = $region13
  $region12: #{pointnetfeat_forward.3} parent=0 // pred_region
    _
  $region13: #{pointnetfeat_forward.3} parent=0 // pred_fallthru
    _
  // Predicated region
  $region14: #{pointnetfeat_forward.3} parent=0 // pred_check
    _
  $region15: #{pointnetfeat_forward.3} parent=0 // pred_check_branch
    %17 = sbr.rel (0) target = $region17
  $region16: #{pointnetfeat_forward.3} parent=0 // pred_region
    _
  $region17: #{pointnetfeat_forward.3} parent=0 // pred_fallthru
    _
  // Predicated region
  $region18: #{pointnetfeat_forward.3} parent=0 // pred_check
    _
  $region19: #{pointnetfeat_forward.3} parent=0 // pred_check_branch
    %19 = sbr.rel (0) target = $region21
  $region20: #{pointnetfeat_forward.3} parent=0 // pred_region
    _
  $region21: #{pointnetfeat_forward.3} parent=0 // pred_fallthru
    _
  %p21 = scmp.eq.s32.totalorder 0, 0
  // Predicated region
  $region22: #{pointnetfeat_forward.3} parent=0 // pred_check
    %p22 = pneg %p21
  $region23: #{pointnetfeat_forward.3} parent=0 // pred_check_branch
    %24 = sbr.rel (%p22) target = $region25
  $region24: #{pointnetfeat_forward.3} parent=0 // pred_region
    %25 = vst [vmem:[%s5] sm:$0x1] 0.0
  $region25: #{pointnetfeat_forward.3} parent=0 // pred_fallthru
    _
  %v26 = vld [vmem:[%s0] sm:$0xff]
  %v27 = vld [vmem:[%s0 + $0x8] sm:$0xff]
  %v28 = vld [vmem:[%s1] sm:$0x1]
  %30 = vset.pattern.permute.xlu0 0
  %31 = vperm.xlu0 %30, %v26
  %v32 = vpop.permute.xlu0 %31
  %35 = vset.pattern.permute.xlu0 0
  %36 = vperm.xlu0 %35, %v27
  %v37 = vpop.permute.xlu0 %36
  %v39 = vlaneseq
  %v40 = vshrl.u32 %v39, 7
  %v41 = vsub.s32 0, %v40
  %v42 = vrot.slane %v28, %v41
  %v43 = vmul.f32 %v32, %v42
  %v44 = vmul.f32 %v37, %v42
  %v45 = vld [vmem:[%s1 + $0x1] sm:$0x1]
  %46 = vset.pattern.permute.xlu0 1
  %47 = vperm.xlu0 %46, %v26
  %v48 = vpop.permute.xlu0 %47
  %50 = vset.pattern.permute.xlu0 1
  %51 = vperm.xlu0 %50, %v27
  %v52 = vpop.permute.xlu0 %51
  %v54 = vlaneseq
  %v55 = vshrl.u32 %v54, 7
  %v56 = vsub.s32 0, %v55
  %v57 = vrot.slane %v45, %v56
  %v58 = vmul.f32 %v48, %v57
  %v59 = vmul.f32 %v52, %v57
  %v60 = vadd.f32 %v43, %v58
  %v61 = vadd.f32 %v44, %v59
  %v62 = vld [vmem:[%s1 + $0x2] sm:$0x1]
  %63 = vset.pattern.permute.xlu0 2
  %64 = vperm.xlu0 %63, %v26
  %v65 = vpop.permute.xlu0 %64
  %67 = vset.pattern.permute.xlu0 2
  %68 = vperm.xlu0 %67, %v27
  %v69 = vpop.permute.xlu0 %68
  %v71 = vlaneseq
  %v72 = vshrl.u32 %v71, 7
  %v73 = vsub.s32 0, %v72
  %v74 = vrot.slane %v62, %v73
  %v75 = vmul.f32 %v65, %v74
  %v76 = vmul.f32 %v69, %v74
  %v77 = vadd.f32 %v60, %v75
  %v78 = vadd.f32 %v61, %v76
  %v79 = vld [vmem:[%s2] sm:$0x1]
  %v81 = vlaneseq
  %v82 = vshrl.u32 %v81, 7
  %v83 = vsub.s32 0, %v82
  %v84 = vrot.slane %v79, %v83
  %v86 = vadd.f32 %v77, %v84
  %v87 = vadd.f32 %v78, %v84
  %v88 = vmax.f32 %v86, 0.0
  %v89 = vmax.f32 %v87, 0.0
  %v90 = vpack.c.bf16 %v89, %v88
  %v91 = vld [vmem:[%s3] sm:$0xf]
  %v92 = vld [vmem:[%s3 + $0x4] sm:$0xf]
  %v93 = vld [vmem:[%s3 + $0x8] sm:$0xf]
  %v94 = vld [vmem:[%s3 + $0xc] sm:$0xf]
  %v95 = vld [vmem:[%s3 + $0x10] sm:$0xf]
  %v96 = vld [vmem:[%s3 + $0x14] sm:$0xf]
  %v97 = vld [vmem:[%s3 + $0x18] sm:$0xf]
  %v98 = vld [vmem:[%s3 + $0x1c] sm:$0xf]
  %v99 = vld [vmem:[%s4] sm:$0x1]
  %v101 = vlaneseq
  %v102 = vshrl.u32 %v101, 7
  %v103 = vsub.s32 0, %v102
  %v104 = vrot.slane %v99, %v103
  %v114 = vunpack.c.l.b16 %v91
  %v115 = vunpack.c.l.b16 %v92
  %v116 = vunpack.c.l.b16 %v93
  %v117 = vunpack.c.l.b16 %v94
  %v118 = vunpack.c.l.b16 %v95
  %v119 = vunpack.c.l.b16 %v96
  %v120 = vunpack.c.l.b16 %v97
  %v121 = vunpack.c.l.b16 %v98
  %v122 = vpack.c.b16 %v115, %v114
  %v123 = vpack.c.b16 %v117, %v116
  %v124 = vpack.c.b16 %v119, %v118
  %v125 = vpack.c.b16 %v121, %v120
  %vm130 = vcmask 523264
  %v132 = vsel %vm130, %v90, 0
  %134 = vmatprep.subr.bf16.mxu0 0
  %135 = vmatpush1.bf16.msra.mxu0 %v122
  %136 = vmatprep.subr.bf16.mxu0 0
  %137 = vmatpush1.bf16.msra.mxu0 %v123
  %138 = vmatprep.subr.bf16.mxu0 0
  %139 = vmatpush1.bf16.msra.mxu0 %v124
  %140 = vmatprep.subr.bf16.mxu0 0
  %141 = vmatpush1.bf16.msra.mxu0 %v125
  %142 = vmatprep.subr.bf16.mxu0 0
  %143 = vmatpush1.bf16.msra.mxu0 0
  %144 = vmatprep.subr.bf16.mxu0 0
  %145 = vmatpush1.bf16.msra.mxu0 0
  %146 = vmatprep.subr.bf16.mxu0 0
  %147 = vmatpush1.bf16.msra.mxu0 0
  %148 = vmatprep.subr.bf16.mxu0 0
  %149 = vmatpush1.bf16.msra.mxu0 0
  %150 = vmatprep.subr.bf16.mxu0 0
  %151 = vmatpush1.bf16.msra.mxu0 0
  %152 = vmatprep.subr.bf16.mxu0 0
  %153 = vmatpush1.bf16.msra.mxu0 0
  %154 = vmatprep.subr.bf16.mxu0 0
  %155 = vmatpush1.bf16.msra.mxu0 0
  %156 = vmatprep.subr.bf16.mxu0 0
  %157 = vmatpush1.bf16.msra.mxu0 0
  %158 = vmatprep.subr.bf16.mxu0 0
  %159 = vmatpush1.bf16.msra.mxu0 0
  %160 = vmatprep.subr.bf16.mxu0 0
  %161 = vmatpush1.bf16.msra.mxu0 0
  %162 = vmatprep.subr.bf16.mxu0 0
  %163 = vmatpush1.bf16.msra.mxu0 0
  %164 = vmatprep.subr.bf16.mxu0 0
  %165 = vmatpush1.bf16.msra.mxu0 0
  %166 = vmatprep.mubr.bf16.mxu0 0
  %167 = vmatmul.mubr.bf16.gmra.mrb[0].mxu0 %v132
  %v168 = vpop.f32.mrb[0].mxu0
  %v169 = vadd.f32 %v104, %v168
  %v170 = vpop.f32.mrb[0].mxu0
  %v171 = vpop.f32.mrb[0].mxu0
  %v172 = vadd.f32 %v104, %v171
  %v173 = vpop.f32.mrb[0].mxu0
  %174 = vdwg.mxu0
  %v175 = vmax.f32 %v169, 0.0
  %v176 = vmax.f32 %v172, 0.0
  %v177 = vld [vmem:[%s5] sm:$0x1]
  %v178 = vadd.f32 %v175, %v176
  %v179 = vrot.slane %v178, 4
  %v180 = vadd.f32 %v178, %v179
  %v181 = vrot.slane %v180, 2
  %v182 = vadd.f32 %v180, %v181
  %v183 = vrot.slane %v182, 1
  %v184 = vadd.f32 %v182, %v183
  %v185 = vadd.f32 %v177, %v184
  %186 = vst [vmem:[%s5] sm:$0x1] %v185
  // Predicated region
  $region26: #{pointnetfeat_forward.3} parent=0 // pred_check
    _
  $region27: #{pointnetfeat_forward.3} parent=0 // pred_check_branch
    %188 = sbr.rel (0) target = $region29
  $region28: #{pointnetfeat_forward.3} parent=0 // pred_region
    _
  $region29: #{pointnetfeat_forward.3} parent=0 // pred_fallthru
    _
  // Predicated region
  $region30: #{pointnetfeat_forward.3} parent=0 // pred_check
    _
  $region31: #{pointnetfeat_forward.3} parent=0 // pred_check_branch
    %190 = sbr.rel (0) target = $region33
  $region32: #{pointnetfeat_forward.3} parent=0 // pred_region
    _
  $region33: #{pointnetfeat_forward.3} parent=0 // pred_fallthru
    _

</llo_original>
